<compile_context>
chip_gen: v7x
topology: tpu7x:2x2x1
jax: 0.10.0
libtpu: 0.0.40
codegen_flags: <defaults>
</compile_context>

<pallas_src>
import functools

import numpy as np
import jax
import jax.numpy as jnp
from jax import lax
from jax.experimental import pallas as pl
from jax.experimental.pallas import tpu as pltpu


# ----------------------------------------------------------------------------
# Pallas kernel: whole batch in one grid step, everything channel-major (rows =
# channels on sublanes, flattened batch*spatial on the lanes).
# ----------------------------------------------------------------------------
def align_kernel(low_ref, high_ref, wl_ref, wh_ref, wf_ref, m_ref, gb_ref,
                 mask_ref, out_ref, *, H, W, h2, w2):
    f32 = jnp.float32
    NHW = low_ref.shape[1]          # N * H * W    (lane axis, multiple of 128)
    Kh = high_ref.shape[1]          # N * h2 * w2

    low_cm = low_ref[...]           # (Cin, NHW)
    high_cm = high_ref[...]         # (Cin, Kh)  original h_feature (for the warp)

    # ---- 1x1 convs (weights zero-padded on host -> rows already in cat order) --
    low_d = jnp.dot(wl_ref[...], low_cm, preferred_element_type=f32)     # (C2, NHW)
    high_d = jnp.dot(wh_ref[...], high_cm, preferred_element_type=f32)   # (C2, Kh)

    # ---- bilinear upsample: one matmul vs dense block-diag interp matrix -------
    up = jnp.dot(high_d, m_ref[...], preferred_element_type=f32)         # (C2, NHW)

    # ---- torch.cat([h_up, low], 1) == add of the two padded-weight results -----
    feat = up + low_d                                                     # (C2, NHW)

    # ---- flow_make 3x3 conv (pad=1): roll-based im2col, one K=9*C2 matmul ------
    cols = []
    for t in range(9):                                  # static taps
        dy, dx = t // 3 - 1, t % 3 - 1
        d = dy * W + dx                                 # source-lane offset
        cols.append(feat if d == 0 else pltpu.roll(feat, (-d) % NHW, axis=1))
    im2col = jnp.concatenate(cols, axis=0) * mask_ref[...]               # (9*C2, NHW)
    flow = jnp.dot(wf_ref[...], im2col, preferred_element_type=f32)      # (2, NHW)

    # ---- flow_warp: bilinear grid_sample (zeros pad, align_corners=False) ------
    gb = gb_ref[...]                                                      # (3, NHW)
    sx = gb[0:1, :] + flow[0:1, :] * (1.0 / W)
    sy = gb[1:2, :] + flow[1:2, :] * (1.0 / H)
    yoff = gb[2:3, :].astype(jnp.int32)                 # per-lane batch row offset n*h2
    ix = (sx + 1.0) * (w2 * 0.5) - 0.5
    iy = (sy + 1.0) * (h2 * 0.5) - 0.5
    x0f = jnp.floor(ix)
    y0f = jnp.floor(iy)
    x0 = x0f.astype(jnp.int32)
    y0 = y0f.astype(jnp.int32)
    x1 = x0 + 1
    y1 = y0 + 1
    wx1 = ix - x0f
    wx0 = 1.0 - wx1
    wy1 = iy - y0f
    wy0 = 1.0 - wy1
    vx0 = ((x0 >= 0) & (x0 < w2)).astype(f32)
    vx1 = ((x1 >= 0) & (x1 < w2)).astype(f32)
    vy0 = ((y0 >= 0) & (y0 < h2)).astype(f32)
    vy1 = ((y1 >= 0) & (y1 < h2)).astype(f32)
    yg0 = y0 + yoff                                     # rows of the batch-stacked image
    yg1 = y1 + yoff

    # fused gather matrix G[k, q] = Gy(row(k), q) * Gx(col(k), q); the validity
    # masks on y keep the per-batch blocks separate (no cross-image leakage).
    k_iota = lax.broadcasted_iota(jnp.int32, (Kh, NHW), 0)
    if (w2 & (w2 - 1)) == 0:                            # power-of-two: pure VPU bit ops
        jrow = jnp.bitwise_and(k_iota, w2 - 1)
        irow = jnp.right_shift(k_iota, w2.bit_length() - 1)
    else:                                               # generic fallback
        jrow = k_iota % w2
        irow = k_iota // w2
    gx = ((jrow == x0).astype(f32) * (wx0 * vx0) +
          (jrow == x1).astype(f32) * (wx1 * vx1))       # (Kh, NHW)
    gy = ((irow == yg0).astype(f32) * (wy0 * vy0) +
          (irow == yg1).astype(f32) * (wy1 * vy1))      # (Kh, NHW)

    out_ref[...] = jnp.dot(high_cm, gx * gy,
                           preferred_element_type=f32).astype(out_ref.dtype)


# ----------------------------------------------------------------------------
# host-side (shape-only) helpers
# ----------------------------------------------------------------------------
def _bilinear_matrix(out_size, in_size):
    """Per-axis weights of F.interpolate(mode='bilinear', align_corners=False)."""
    dst = np.arange(out_size, dtype=np.float64)
    scale = in_size / out_size
    src = np.maximum((dst + 0.5) * scale - 0.5, 0.0)
    i0 = np.minimum(np.floor(src).astype(np.int64), in_size - 1)
    i1 = np.minimum(i0 + 1, in_size - 1)
    l1 = src - i0
    l0 = 1.0 - l1
    m = np.zeros((out_size, in_size), dtype=np.float32)
    np.add.at(m, (np.arange(out_size), i0), l0)
    np.add.at(m, (np.arange(out_size), i1), l1)
    return m


def init_params(key, inplane, outplane):
    k1, k2, k3 = jax.random.split(key, 3)
    return {
        'w_l': jax.random.normal(k1, (outplane, inplane), jnp.float32) * 0.1,
        'w_h': jax.random.normal(k2, (outplane, inplane), jnp.float32) * 0.1,
        'w_flow': jax.random.normal(k3, (2, 2 * outplane, 3, 3), jnp.float32) * 0.1,
    }


def align_module_forward(low, high, params):
    """low: (N, Cin, H, W), high: (N, Cin, h2, w2)  ->  (N, Cin, H, W)."""
    N, Cin, H, W = low.shape
    _, _, h2, w2 = high.shape
    Cout = params['w_l'].shape[0]
    C2 = 2 * Cout
    HW = H * W
    NHW = N * HW
    Kh = N * h2 * w2

    # ---- static tables (shape-only, data-independent) ------------------------
    ah = _bilinear_matrix(H, h2)                                     # (H, h2)
    aw = _bilinear_matrix(W, w2)                                     # (W, w2)
    m_img = np.einsum('yi,xj->ijyx', ah, aw).reshape(h2 * w2, HW)
    m_bd = np.kron(np.eye(N, dtype=np.float32),
                   m_img.astype(np.float32))                         # (Kh, NHW)

    bx = np.linspace(-1.0, 1.0, W)
    by = np.linspace(-1.0, 1.0, H)
    gb = np.stack([
        np.tile(np.tile(bx, H), N),                                  # x base coord
        np.tile(np.repeat(by, W), N),                                # y base coord
        np.repeat(np.arange(N) * h2, HW).astype(np.float64),         # batch row offset
    ]).astype(np.float32)                                            # (3, NHW)

    # per-tap zero-padding edge masks for the 3x3 conv, expanded to im2col rows
    yy = np.repeat(np.arange(H), W)
    xx = np.tile(np.arange(W), H)
    tap_masks = np.ones((9, HW), np.float32)
    for t in range(9):
        dy, dx = t // 3 - 1, t % 3 - 1
        m = np.ones(HW, np.float32)
        if dy == -1:
            m *= (yy > 0)
        if dy == 1:
            m *= (yy < H - 1)
        if dx == -1:
            m *= (xx > 0)
        if dx == 1:
            m *= (xx < W - 1)
        tap_masks[t] = m
    im2col_mask = np.tile(np.repeat(tap_masks, C2, axis=0), (1, N))  # (9*C2, NHW)

    # weights: zero-pad 1x1 convs so (up + low) forms the channel concat; flatten
    # the 3x3 conv to the im2col layout (2, 9*C2) with columns ordered (tap, chan)
    zero = jnp.zeros((Cout, Cin), jnp.float32)
    wh_pad = jnp.concatenate([params['w_h'], zero], axis=0)          # (C2, Cin)
    wl_pad = jnp.concatenate([zero, params['w_l']], axis=0)          # (C2, Cin)
    wf2d = jnp.transpose(params['w_flow'], (0, 2, 3, 1)).reshape(2, 9 * C2)

    # channel-major, batch folded onto the lane axis
    low_cm = jnp.transpose(low, (1, 0, 2, 3)).reshape(Cin, NHW)
    high_cm = jnp.transpose(high, (1, 0, 2, 3)).reshape(Cin, Kh)

    kernel = functools.partial(align_kernel, H=H, W=W, h2=h2, w2=w2)
    out = pl.pallas_call(
        kernel,
        out_shape=jax.ShapeDtypeStruct((Cin, NHW), jnp.float32),
        grid_spec=pltpu.PrefetchScalarGridSpec(
            num_scalar_prefetch=0,
            grid=(1,),
            in_specs=[
                pl.BlockSpec((Cin, NHW), lambda i: (0, 0)),
                pl.BlockSpec((Cin, Kh), lambda i: (0, 0)),
                pl.BlockSpec((C2, Cin), lambda i: (0, 0)),
                pl.BlockSpec((C2, Cin), lambda i: (0, 0)),
                pl.BlockSpec((2, 9 * C2), lambda i: (0, 0)),
                pl.BlockSpec((Kh, NHW), lambda i: (0, 0)),
                pl.BlockSpec((3, NHW), lambda i: (0, 0)),
                pl.BlockSpec((9 * C2, NHW), lambda i: (0, 0)),
            ],
            out_specs=pl.BlockSpec((Cin, NHW), lambda i: (0, 0)),
        ),
        compiler_params=pltpu.CompilerParams(
            dimension_semantics=("arbitrary",)),
    )(low_cm, high_cm, wl_pad, wh_pad, wf2d,
      jnp.asarray(m_bd), jnp.asarray(gb), jnp.asarray(im2col_mask))

    return jnp.transpose(out.reshape(Cin, N, H, W), (1, 0, 2, 3))


# ----------------------------------------------------------------------------
# independent pure-JAX reference (different formulation: dense interp einsum,
# lax conv, explicit gathers) for a correctness check
# ----------------------------------------------------------------------------
def reference_forward(low, high, wl, wh, wf):
    N, Cin, H, W = low.shape
    _, _, h2, w2 = high.shape
    f32 = jnp.float32
    hp = lax.Precision.HIGHEST
    ah = jnp.asarray(_bilinear_matrix(H, h2), f32)
    aw = jnp.asarray(_bilinear_matrix(W, w2), f32)

    low_d = jnp.einsum('oc,nchw->nohw', wl, low, precision=hp)
    high_d = jnp.einsum('oc,nchw->nohw', wh, high, precision=hp)
    up = jnp.einsum('yi,xj,noij->noyx', ah, aw, high_d, precision=hp)
    feat = jnp.concatenate([up, low_d], axis=1)
    flow = lax.conv_general_dilated(
        feat, wf, window_strides=(1, 1), padding=((1, 1), (1, 1)),
        dimension_numbers=('NCHW', 'OIHW', 'NCHW'), precision=hp)

    base_x = jnp.linspace(-1.0, 1.0, W, dtype=f32)[None, None, :]
    base_y = jnp.linspace(-1.0, 1.0, H, dtype=f32)[None, :, None]
    gx = base_x + flow[:, 0] / W
    gy = base_y + flow[:, 1] / H
    ix = (gx + 1.0) * (w2 * 0.5) - 0.5
    iy = (gy + 1.0) * (h2 * 0.5) - 0.5
    x0 = jnp.floor(ix)
    y0 = jnp.floor(iy)
    x1 = x0 + 1.0
    y1 = y0 + 1.0
    wx1 = ix - x0
    wx0 = 1.0 - wx1
    wy1 = iy - y0
    wy0 = 1.0 - wy1
    nn = jnp.arange(N)[:, None, None, None]
    cc = jnp.arange(Cin)[None, :, None, None]

    def corner(yc, xc, wgt):
        valid = ((xc >= 0) & (xc <= w2 - 1) & (yc >= 0) & (yc <= h2 - 1)).astype(f32)
        yi = jnp.clip(yc, 0, h2 - 1).astype(jnp.int32)[:, None]
        xi = jnp.clip(xc, 0, w2 - 1).astype(jnp.int32)[:, None]
        return high[nn, cc, yi, xi] * (wgt * valid)[:, None]

    return (corner(y0, x0, wy0 * wx0) + corner(y0, x1, wy0 * wx1) +
            corner(y1, x0, wy1 * wx0) + corner(y1, x1, wy1 * wx1))


if __name__ == "__main__":
    key = jax.random.PRNGKey(0)
    kp, kl, kh = jax.random.split(key, 3)

    # inplane = outplane = 4; low_feature 16x16, h_feature 8x8 (upsampled/warped)
    N, Cin, Cout = 2, 4, 4
    H, W = 16, 16
    h2, w2 = 8, 8

    params = init_params(kp, Cin, Cout)
    low = jax.random.normal(kl, (N, Cin, H, W), jnp.float32)     # NCHW
    high = jax.random.normal(kh, (N, Cin, h2, w2), jnp.float32)  # NCHW

    out = align_module_forward(low, high, params)
    out = jax.block_until_ready(out)

    ref = reference_forward(low, high, params['w_l'], params['w_h'],
                            params['w_flow'])
    ref = jax.block_until_ready(ref)

    assert out.shape == (N, Cin, H, W)
    assert np.allclose(np.asarray(out), np.asarray(ref), rtol=1e-3, atol=1e-3), \
        "Pallas output mismatch vs JAX reference"
    print("KERNEL_OK")
</pallas_src>

<mosaic_0001>
module attributes {stable_mosaic.version = 11 : i64} {
  func.func @align_kernel(%arg0: i32, %arg1: memref<4x512xf32, #tpu.memory_space<vmem>>, %arg2: memref<4x128xf32, #tpu.memory_space<vmem>>, %arg3: memref<8x4xf32, #tpu.memory_space<vmem>>, %arg4: memref<8x4xf32, #tpu.memory_space<vmem>>, %arg5: memref<2x72xf32, #tpu.memory_space<vmem>>, %arg6: memref<128x512xf32, #tpu.memory_space<vmem>>, %arg7: memref<3x512xf32, #tpu.memory_space<vmem>>, %arg8: memref<72x512xf32, #tpu.memory_space<vmem>>, %arg9: memref<4x512xf32, #tpu.memory_space<vmem>>) attributes {dimension_semantics = [#tpu.dimension_semantics<arbitrary>], iteration_bounds = array<i64: 1>, scalar_prefetch = 0 : i64, scratch_operands = 0 : i64, tpu.core_type = #tpu.core_type<tc>, window_params = [{pipeline_mode = #tpu.pipeline_mode<synchronous>, transform_indices = @transform_0, window_bounds = array<i64: 4, 512>}, {pipeline_mode = #tpu.pipeline_mode<synchronous>, transform_indices = @transform_1, window_bounds = array<i64: 4, 128>}, {pipeline_mode = #tpu.pipeline_mode<synchronous>, transform_indices = @transform_2, window_bounds = array<i64: 8, 4>}, {pipeline_mode = #tpu.pipeline_mode<synchronous>, transform_indices = @transform_3, window_bounds = array<i64: 8, 4>}, {pipeline_mode = #tpu.pipeline_mode<synchronous>, transform_indices = @transform_4, window_bounds = array<i64: 2, 72>}, {pipeline_mode = #tpu.pipeline_mode<synchronous>, transform_indices = @transform_5, window_bounds = array<i64: 128, 512>}, {pipeline_mode = #tpu.pipeline_mode<synchronous>, transform_indices = @transform_6, window_bounds = array<i64: 3, 512>}, {pipeline_mode = #tpu.pipeline_mode<synchronous>, transform_indices = @transform_7, window_bounds = array<i64: 72, 512>}, {pipeline_mode = #tpu.pipeline_mode<synchronous>, transform_indices = @transform_8, window_bounds = array<i64: 4, 512>}]} {
    %c0 = arith.constant 0 : index
    %c0_0 = arith.constant 0 : index
    %0 = vector.load %arg1[%c0, %c0_0] : memref<4x512xf32, #tpu.memory_space<vmem>>, vector<4x512xf32>
    %c0_1 = arith.constant 0 : index
    %c0_2 = arith.constant 0 : index
    %1 = vector.load %arg2[%c0_1, %c0_2] : memref<4x128xf32, #tpu.memory_space<vmem>>, vector<4x128xf32>
    %c0_3 = arith.constant 0 : index
    %c0_4 = arith.constant 0 : index
    %2 = vector.load %arg3[%c0_3, %c0_4] : memref<8x4xf32, #tpu.memory_space<vmem>>, vector<8x4xf32>
    %cst = arith.constant dense<0.000000e+00> : vector<8x512xf32>
    %3 = tpu.matmul %2, %0, %cst {dimension_numbers = #tpu.dot_dimension_numbers<[1], [0], [0], [1], [0, 0, 1, 1], [], []>} : vector<8x4xf32>, vector<4x512xf32>, vector<8x512xf32> -> vector<8x512xf32>
    %c0_5 = arith.constant 0 : index
    %c0_6 = arith.constant 0 : index
    %4 = vector.load %arg4[%c0_5, %c0_6] : memref<8x4xf32, #tpu.memory_space<vmem>>, vector<8x4xf32>
    %cst_7 = arith.constant dense<0.000000e+00> : vector<8x128xf32>
    %5 = tpu.matmul %4, %1, %cst_7 {dimension_numbers = #tpu.dot_dimension_numbers<[1], [0], [0], [1], [0, 0, 1, 1], [], []>} : vector<8x4xf32>, vector<4x128xf32>, vector<8x128xf32> -> vector<8x128xf32>
    %c0_8 = arith.constant 0 : index
    %c0_9 = arith.constant 0 : index
    %6 = vector.load %arg6[%c0_8, %c0_9] : memref<128x512xf32, #tpu.memory_space<vmem>>, vector<128x512xf32>
    %cst_10 = arith.constant dense<0.000000e+00> : vector<8x512xf32>
    %7 = tpu.matmul %5, %6, %cst_10 {dimension_numbers = #tpu.dot_dimension_numbers<[1], [0], [0], [1], [0, 0, 1, 1], [], []>} : vector<8x128xf32>, vector<128x512xf32>, vector<8x512xf32> -> vector<8x512xf32>
    %8 = arith.addf %7, %3 : vector<8x512xf32>
    %c17_i32 = arith.constant 17 : i32
    %9 = tpu.dynamic_rotate %8 by %c17_i32 dim 1 : vector<8x512xf32>, i32 -> vector<8x512xf32>
    %c16_i32 = arith.constant 16 : i32
    %10 = tpu.dynamic_rotate %8 by %c16_i32 dim 1 : vector<8x512xf32>, i32 -> vector<8x512xf32>
    %c15_i32 = arith.constant 15 : i32
    %11 = tpu.dynamic_rotate %8 by %c15_i32 dim 1 : vector<8x512xf32>, i32 -> vector<8x512xf32>
    %c1_i32 = arith.constant 1 : i32
    %12 = tpu.dynamic_rotate %8 by %c1_i32 dim 1 : vector<8x512xf32>, i32 -> vector<8x512xf32>
    %c511_i32 = arith.constant 511 : i32
    %13 = tpu.dynamic_rotate %8 by %c511_i32 dim 1 : vector<8x512xf32>, i32 -> vector<8x512xf32>
    %c497_i32 = arith.constant 497 : i32
    %14 = tpu.dynamic_rotate %8 by %c497_i32 dim 1 : vector<8x512xf32>, i32 -> vector<8x512xf32>
    %c496_i32 = arith.constant 496 : i32
    %15 = tpu.dynamic_rotate %8 by %c496_i32 dim 1 : vector<8x512xf32>, i32 -> vector<8x512xf32>
    %c495_i32 = arith.constant 495 : i32
    %16 = tpu.dynamic_rotate %8 by %c495_i32 dim 1 : vector<8x512xf32>, i32 -> vector<8x512xf32>
    %17 = tpu.concatenate %9, %10, %11, %12, %8, %13, %14, %15, %16 in 0 : vector<8x512xf32>, vector<8x512xf32>, vector<8x512xf32>, vector<8x512xf32>, vector<8x512xf32>, vector<8x512xf32>, vector<8x512xf32>, vector<8x512xf32>, vector<8x512xf32> -> vector<72x512xf32>
    %c0_11 = arith.constant 0 : index
    %c0_12 = arith.constant 0 : index
    %18 = vector.load %arg8[%c0_11, %c0_12] : memref<72x512xf32, #tpu.memory_space<vmem>>, vector<72x512xf32>
    %19 = arith.mulf %17, %18 : vector<72x512xf32>
    %c0_13 = arith.constant 0 : index
    %c0_14 = arith.constant 0 : index
    %20 = vector.load %arg5[%c0_13, %c0_14] : memref<2x72xf32, #tpu.memory_space<vmem>>, vector<2x72xf32>
    %cst_15 = arith.constant dense<0.000000e+00> : vector<2x512xf32>
    %21 = tpu.matmul %20, %19, %cst_15 {dimension_numbers = #tpu.dot_dimension_numbers<[1], [0], [0], [1], [0, 0, 1, 1], [], []>} : vector<2x72xf32>, vector<72x512xf32>, vector<2x512xf32> -> vector<2x512xf32>
    %c0_16 = arith.constant 0 : index
    %c0_17 = arith.constant 0 : index
    %22 = vector.load %arg7[%c0_16, %c0_17] : memref<3x512xf32, #tpu.memory_space<vmem>>, vector<3x512xf32>
    %23 = vector.extract_strided_slice %22 {offsets = [0, 0], sizes = [1, 512], strides = [1, 1]} : vector<3x512xf32> to vector<1x512xf32>
    %24 = vector.extract_strided_slice %21 {offsets = [0, 0], sizes = [1, 512], strides = [1, 1]} : vector<2x512xf32> to vector<1x512xf32>
    %cst_18 = arith.constant 6.250000e-02 : f32
    %25 = vector.broadcast %cst_18 : f32 to vector<1x512xf32>
    %26 = arith.mulf %24, %25 : vector<1x512xf32>
    %27 = arith.addf %23, %26 : vector<1x512xf32>
    %28 = vector.extract_strided_slice %22 {offsets = [1, 0], sizes = [1, 512], strides = [1, 1]} : vector<3x512xf32> to vector<1x512xf32>
    %29 = vector.extract_strided_slice %21 {offsets = [1, 0], sizes = [1, 512], strides = [1, 1]} : vector<2x512xf32> to vector<1x512xf32>
    %cst_19 = arith.constant 6.250000e-02 : f32
    %30 = vector.broadcast %cst_19 : f32 to vector<1x512xf32>
    %31 = arith.mulf %29, %30 : vector<1x512xf32>
    %32 = arith.addf %28, %31 : vector<1x512xf32>
    %33 = vector.extract_strided_slice %22 {offsets = [2, 0], sizes = [1, 512], strides = [1, 1]} : vector<3x512xf32> to vector<1x512xf32>
    %34 = arith.fptosi %33 : vector<1x512xf32> to vector<1x512xi32>
    %cst_20 = arith.constant 1.000000e+00 : f32
    %35 = vector.broadcast %cst_20 : f32 to vector<1x512xf32>
    %36 = arith.addf %27, %35 : vector<1x512xf32>
    %cst_21 = arith.constant 4.000000e+00 : f32
    %37 = vector.broadcast %cst_21 : f32 to vector<1x512xf32>
    %38 = arith.mulf %36, %37 : vector<1x512xf32>
    %cst_22 = arith.constant 5.000000e-01 : f32
    %39 = vector.broadcast %cst_22 : f32 to vector<1x512xf32>
    %40 = arith.subf %38, %39 : vector<1x512xf32>
    %cst_23 = arith.constant 1.000000e+00 : f32
    %41 = vector.broadcast %cst_23 : f32 to vector<1x512xf32>
    %42 = arith.addf %32, %41 : vector<1x512xf32>
    %cst_24 = arith.constant 4.000000e+00 : f32
    %43 = vector.broadcast %cst_24 : f32 to vector<1x512xf32>
    %44 = arith.mulf %42, %43 : vector<1x512xf32>
    %cst_25 = arith.constant 5.000000e-01 : f32
    %45 = vector.broadcast %cst_25 : f32 to vector<1x512xf32>
    %46 = arith.subf %44, %45 : vector<1x512xf32>
    %47 = math.floor %40 : vector<1x512xf32>
    %48 = math.floor %46 : vector<1x512xf32>
    %49 = arith.fptosi %47 : vector<1x512xf32> to vector<1x512xi32>
    %50 = arith.fptosi %48 : vector<1x512xf32> to vector<1x512xi32>
    %c1_i32_26 = arith.constant 1 : i32
    %51 = vector.broadcast %c1_i32_26 : i32 to vector<1x512xi32>
    %52 = arith.addi %49, %51 : vector<1x512xi32>
    %c1_i32_27 = arith.constant 1 : i32
    %53 = vector.broadcast %c1_i32_27 : i32 to vector<1x512xi32>
    %54 = arith.addi %50, %53 : vector<1x512xi32>
    %55 = arith.subf %40, %47 : vector<1x512xf32>
    %cst_28 = arith.constant 1.000000e+00 : f32
    %56 = vector.broadcast %cst_28 : f32 to vector<1x512xf32>
    %57 = arith.subf %56, %55 : vector<1x512xf32>
    %58 = arith.subf %46, %48 : vector<1x512xf32>
    %cst_29 = arith.constant 1.000000e+00 : f32
    %59 = vector.broadcast %cst_29 : f32 to vector<1x512xf32>
    %60 = arith.subf %59, %58 : vector<1x512xf32>
    %c0_i32 = arith.constant 0 : i32
    %61 = vector.broadcast %c0_i32 : i32 to vector<1x512xi32>
    %62 = arith.cmpi sge, %49, %61 : vector<1x512xi32>
    %c8_i32 = arith.constant 8 : i32
    %63 = vector.broadcast %c8_i32 : i32 to vector<1x512xi32>
    %64 = arith.cmpi slt, %49, %63 : vector<1x512xi32>
    %65 = arith.andi %62, %64 : vector<1x512xi1>
    %66 = arith.extui %65 : vector<1x512xi1> to vector<1x512xi32>
    %67 = arith.sitofp %66 : vector<1x512xi32> to vector<1x512xf32>
    %c0_i32_30 = arith.constant 0 : i32
    %68 = vector.broadcast %c0_i32_30 : i32 to vector<1x512xi32>
    %69 = arith.cmpi sge, %52, %68 : vector<1x512xi32>
    %c8_i32_31 = arith.constant 8 : i32
    %70 = vector.broadcast %c8_i32_31 : i32 to vector<1x512xi32>
    %71 = arith.cmpi slt, %52, %70 : vector<1x512xi32>
    %72 = arith.andi %69, %71 : vector<1x512xi1>
    %73 = arith.extui %72 : vector<1x512xi1> to vector<1x512xi32>
    %74 = arith.sitofp %73 : vector<1x512xi32> to vector<1x512xf32>
    %c0_i32_32 = arith.constant 0 : i32
    %75 = vector.broadcast %c0_i32_32 : i32 to vector<1x512xi32>
    %76 = arith.cmpi sge, %50, %75 : vector<1x512xi32>
    %c8_i32_33 = arith.constant 8 : i32
    %77 = vector.broadcast %c8_i32_33 : i32 to vector<1x512xi32>
    %78 = arith.cmpi slt, %50, %77 : vector<1x512xi32>
    %79 = arith.andi %76, %78 : vector<1x512xi1>
    %80 = arith.extui %79 : vector<1x512xi1> to vector<1x512xi32>
    %81 = arith.sitofp %80 : vector<1x512xi32> to vector<1x512xf32>
    %c0_i32_34 = arith.constant 0 : i32
    %82 = vector.broadcast %c0_i32_34 : i32 to vector<1x512xi32>
    %83 = arith.cmpi sge, %54, %82 : vector<1x512xi32>
    %c8_i32_35 = arith.constant 8 : i32
    %84 = vector.broadcast %c8_i32_35 : i32 to vector<1x512xi32>
    %85 = arith.cmpi slt, %54, %84 : vector<1x512xi32>
    %86 = arith.andi %83, %85 : vector<1x512xi1>
    %87 = arith.extui %86 : vector<1x512xi1> to vector<1x512xi32>
    %88 = arith.sitofp %87 : vector<1x512xi32> to vector<1x512xf32>
    %89 = arith.addi %50, %34 : vector<1x512xi32>
    %90 = arith.addi %54, %34 : vector<1x512xi32>
    %91 = tpu.iota {dimensions = array<i32: 0>} : vector<128x512xi32>
    %c7_i32 = arith.constant 7 : i32
    %92 = vector.broadcast %c7_i32 : i32 to vector<128x512xi32>
    %93 = arith.andi %91, %92 : vector<128x512xi32>
    %c3_i32 = arith.constant 3 : i32
    %94 = vector.broadcast %c3_i32 : i32 to vector<128x512xi32>
    %95 = arith.shrsi %91, %94 : vector<128x512xi32>
    %96 = vector.broadcast %49 : vector<1x512xi32> to vector<128x512xi32>
    %97 = arith.cmpi eq, %93, %96 : vector<128x512xi32>
    %98 = arith.extui %97 : vector<128x512xi1> to vector<128x512xi32>
    %99 = arith.sitofp %98 : vector<128x512xi32> to vector<128x512xf32>
    %100 = arith.mulf %57, %67 : vector<1x512xf32>
    %101 = vector.broadcast %100 : vector<1x512xf32> to vector<128x512xf32>
    %102 = arith.mulf %99, %101 : vector<128x512xf32>
    %103 = vector.broadcast %52 : vector<1x512xi32> to vector<128x512xi32>
    %104 = arith.cmpi eq, %93, %103 : vector<128x512xi32>
    %105 = arith.extui %104 : vector<128x512xi1> to vector<128x512xi32>
    %106 = arith.sitofp %105 : vector<128x512xi32> to vector<128x512xf32>
    %107 = arith.mulf %55, %74 : vector<1x512xf32>
    %108 = vector.broadcast %107 : vector<1x512xf32> to vector<128x512xf32>
    %109 = arith.mulf %106, %108 : vector<128x512xf32>
    %110 = arith.addf %102, %109 : vector<128x512xf32>
    %111 = vector.broadcast %89 : vector<1x512xi32> to vector<128x512xi32>
    %112 = arith.cmpi eq, %95, %111 : vector<128x512xi32>
    %113 = arith.extui %112 : vector<128x512xi1> to vector<128x512xi32>
    %114 = arith.sitofp %113 : vector<128x512xi32> to vector<128x512xf32>
    %115 = arith.mulf %60, %81 : vector<1x512xf32>
    %116 = vector.broadcast %115 : vector<1x512xf32> to vector<128x512xf32>
    %117 = arith.mulf %114, %116 : vector<128x512xf32>
    %118 = vector.broadcast %90 : vector<1x512xi32> to vector<128x512xi32>
    %119 = arith.cmpi eq, %95, %118 : vector<128x512xi32>
    %120 = arith.extui %119 : vector<128x512xi1> to vector<128x512xi32>
    %121 = arith.sitofp %120 : vector<128x512xi32> to vector<128x512xf32>
    %122 = arith.mulf %58, %88 : vector<1x512xf32>
    %123 = vector.broadcast %122 : vector<1x512xf32> to vector<128x512xf32>
    %124 = arith.mulf %121, %123 : vector<128x512xf32>
    %125 = arith.addf %117, %124 : vector<128x512xf32>
    %126 = arith.mulf %110, %125 : vector<128x512xf32>
    %cst_36 = arith.constant dense<0.000000e+00> : vector<4x512xf32>
    %127 = tpu.matmul %1, %126, %cst_36 {dimension_numbers = #tpu.dot_dimension_numbers<[1], [0], [0], [1], [0, 0, 1, 1], [], []>} : vector<4x128xf32>, vector<128x512xf32>, vector<4x512xf32> -> vector<4x512xf32>
    %c0_37 = arith.constant 0 : index
    %c0_38 = arith.constant 0 : index
    %128 = vector.load %arg9[%c0_37, %c0_38] : memref<4x512xf32, #tpu.memory_space<vmem>>, vector<4x512xf32>
    tpu.vector_store %arg9[%c0_37, %c0_38], %127 {strides = array<i32>} : memref<4x512xf32, #tpu.memory_space<vmem>>, vector<4x512xf32>,
    return
  }
  func.func @transform_0(%arg0: i32) -> (i32, i32) {
    %c0_i32 = arith.constant 0 : i32
    %c0_i32_0 = arith.constant 0 : i32
    %c0_i32_1 = arith.constant 0 : i32
    return %c0_i32, %c0_i32_0 : i32, i32
  }
  func.func @transform_1(%arg0: i32) -> (i32, i32) {
    %c0_i32 = arith.constant 0 : i32
    %c0_i32_0 = arith.constant 0 : i32
    %c0_i32_1 = arith.constant 0 : i32
    return %c0_i32, %c0_i32_0 : i32, i32
  }
  func.func @transform_2(%arg0: i32) -> (i32, i32) {
    %c0_i32 = arith.constant 0 : i32
    %c0_i32_0 = arith.constant 0 : i32
    %c0_i32_1 = arith.constant 0 : i32
    return %c0_i32, %c0_i32_0 : i32, i32
  }
  func.func @transform_3(%arg0: i32) -> (i32, i32) {
    %c0_i32 = arith.constant 0 : i32
    %c0_i32_0 = arith.constant 0 : i32
    %c0_i32_1 = arith.constant 0 : i32
    return %c0_i32, %c0_i32_0 : i32, i32
  }
  func.func @transform_4(%arg0: i32) -> (i32, i32) {
    %c0_i32 = arith.constant 0 : i32
    %c0_i32_0 = arith.constant 0 : i32
    %c0_i32_1 = arith.constant 0 : i32
    return %c0_i32, %c0_i32_0 : i32, i32
  }
  func.func @transform_5(%arg0: i32) -> (i32, i32) {
    %c0_i32 = arith.constant 0 : i32
    %c0_i32_0 = arith.constant 0 : i32
    %c0_i32_1 = arith.constant 0 : i32
    return %c0_i32, %c0_i32_0 : i32, i32
  }
  func.func @transform_6(%arg0: i32) -> (i32, i32) {
    %c0_i32 = arith.constant 0 : i32
    %c0_i32_0 = arith.constant 0 : i32
    %c0_i32_1 = arith.constant 0 : i32
    return %c0_i32, %c0_i32_0 : i32, i32
  }
  func.func @transform_7(%arg0: i32) -> (i32, i32) {
    %c0_i32 = arith.constant 0 : i32
    %c0_i32_0 = arith.constant 0 : i32
    %c0_i32_1 = arith.constant 0 : i32
    return %c0_i32, %c0_i32_0 : i32, i32
  }
  func.func @transform_8(%arg0: i32) -> (i32, i32) {
    %c0_i32 = arith.constant 0 : i32
    %c0_i32_0 = arith.constant 0 : i32
    %c0_i32_1 = arith.constant 0 : i32
    return %c0_i32, %c0_i32_0 : i32, i32
  }
}

</mosaic_0001>

<llo_original>
// kernel: tpu_custom_call.1
$region0: #{tpu_custom_call.1}
  #allocation0 [shape = 'u32[]', space=smem, size = 0x4, offset = 0x4, fixed_abs, tag = 'smem constant byte address 0x4 - core index']
  #allocation1 [shape = 'u32[144,128]{1,0:T(1,128)}', space=vmem, size = 0x12000, scoped, tag = 'internal scratch']
  %s0 = inlined_call_operand.vmem [shape: f32[4,512], index: 0, kind: input, shape index: {}]
  %s1 = inlined_call_operand.hbm [shape: f32[4,128], index: 1, kind: input, shape index: {}]
  %s2 = inlined_call_operand.vmem [shape: f32[8,4], index: 2, kind: input, shape index: {}]
  %s3 = inlined_call_operand.vmem [shape: f32[8,4], index: 3, kind: input, shape index: {}]
  %s4 = inlined_call_operand.vmem [shape: f32[2,72], index: 4, kind: input, shape index: {}]
  %s5 = inlined_call_operand.hbm [shape: f32[128,512], index: 5, kind: input, shape index: {}]
  %s6 = inlined_call_operand.vmem [shape: f32[3,512], index: 6, kind: input, shape index: {}]
  %s7 = inlined_call_operand.hbm [shape: f32[72,512], index: 7, kind: input, shape index: {}]
  %s8 = inlined_call_operand.hbm [shape: f32[4,512], index: 8, kind: output, shape index: {}]
  %s9 = sld [smem:[#allocation0]]
  $region54: #{tpu_custom_call.1} parent=0
    _
  %s11 = ssub.s32 1, %s9
  %s12 = scalar_select 0, %s11, %s9
  $region1: #{tpu_custom_call.1} parent=0
    #allocation2 [shape = 'u8[2048]{0}', space=vmem, size = 0x800, scoped, tag = 'input window, operand 1, single buffered']
    #allocation3 [shape = 's32[1]{0}', space=sflag, size = 0x4, scoped, tag = 'scoped memory for tpu_custom_call.1']
    #allocation4 [shape = 's32[1]{0}', space=sflag, size = 0x4, scoped, tag = 'scoped memory for tpu_custom_call.1']
    #allocation5 [shape = 'u8[262144]{0}', space=vmem, size = 0x40000, scoped, tag = 'input window, operand 5, single buffered']
    #allocation6 [shape = 's32[1]{0}', space=sflag, size = 0x4, scoped, tag = 'scoped memory for tpu_custom_call.1']
    #allocation7 [shape = 'u8[147456]{0}', space=vmem, size = 0x24000, scoped, tag = 'input window, operand 7, single buffered']
    #allocation8 [shape = 'u8[8192]{0}', space=vmem, size = 0x2000, scoped, tag = 'output window, operand 0, single buffered']
    %13 = vsyncpa [#allocation3], 0
    %14 = vsyncpa [#allocation6], 0
    %15 = vsyncpa [#allocation4], 0
    // Predicated region
    $region2: #{tpu_custom_call.1} parent=1 // pred_check
      _
    $region3: #{tpu_custom_call.1} parent=1 // pred_check_branch
      %17 = sbr.rel (0) target = $region5
    $region4: #{tpu_custom_call.1} parent=1 // pred_region
      _
    $region5: #{tpu_custom_call.1} parent=1 // pred_fallthru
      _
    // Predicated region
    $region6: #{tpu_custom_call.1} parent=1 // pred_check
      _
    $region7: #{tpu_custom_call.1} parent=1 // pred_check_branch
      %19 = sbr.rel (0) target = $region9
    $region8: #{tpu_custom_call.1} parent=1 // pred_region
      %s21 = ssub.s32 64, 64
      %22 = vsyncadd [#allocation3], %s21
      %s24 = sshll.u32 [#allocation2], 4
      %s25 = int_to_ptr.vmem [resolvable:$true] %s24
      %27 = dma.hbm_to_vmem [thread:$0]  %s1, 64, %s25, [#allocation3]
    $region9: #{tpu_custom_call.1} parent=1 // pred_fallthru
      _
    // Predicated region
    $region10: #{tpu_custom_call.1} parent=1 // pred_check
      _
    $region11: #{tpu_custom_call.1} parent=1 // pred_check_branch
      %29 = sbr.rel (0) target = $region13
    $region12: #{tpu_custom_call.1} parent=1 // pred_region
      _
    $region13: #{tpu_custom_call.1} parent=1 // pred_fallthru
      _
    // Predicated region
    $region14: #{tpu_custom_call.1} parent=1 // pred_check
      _
    $region15: #{tpu_custom_call.1} parent=1 // pred_check_branch
      %31 = sbr.rel (0) target = $region17
    $region16: #{tpu_custom_call.1} parent=1 // pred_region
      _
    $region17: #{tpu_custom_call.1} parent=1 // pred_fallthru
      _
    // Predicated region
    $region18: #{tpu_custom_call.1} parent=1 // pred_check
      _
    $region19: #{tpu_custom_call.1} parent=1 // pred_check_branch
      %33 = sbr.rel (0) target = $region21
    $region20: #{tpu_custom_call.1} parent=1 // pred_region
      _
    $region21: #{tpu_custom_call.1} parent=1 // pred_fallthru
      _
    // Predicated region
    $region22: #{tpu_custom_call.1} parent=1 // pred_check
      _
    $region23: #{tpu_custom_call.1} parent=1 // pred_check_branch
      %35 = sbr.rel (0) target = $region25
    $region24: #{tpu_custom_call.1} parent=1 // pred_region
      %s37 = ssub.s32 8192, 8192
      %38 = vsyncadd [#allocation6], %s37
      %s39 = sshll.u32 [#allocation5], 4
      %s40 = int_to_ptr.vmem [resolvable:$true] %s39
      %45 = dma.hbm_to_vmem [thread:$0]  %s5, 8192, %s40, [#allocation6], 512, 512, 32
    $region25: #{tpu_custom_call.1} parent=1 // pred_fallthru
      _
    // Predicated region
    $region26: #{tpu_custom_call.1} parent=1 // pred_check
      _
    $region27: #{tpu_custom_call.1} parent=1 // pred_check_branch
      %47 = sbr.rel (0) target = $region29
    $region28: #{tpu_custom_call.1} parent=1 // pred_region
      _
    $region29: #{tpu_custom_call.1} parent=1 // pred_fallthru
      _
    // Predicated region
    $region30: #{tpu_custom_call.1} parent=1 // pred_check
      _
    $region31: #{tpu_custom_call.1} parent=1 // pred_check_branch
      %49 = sbr.rel (0) target = $region33
    $region32: #{tpu_custom_call.1} parent=1 // pred_region
      %s51 = ssub.s32 4608, 4608
      %52 = vsyncadd [#allocation6], %s51
      %s53 = sshll.u32 [#allocation7], 4
      %s54 = int_to_ptr.vmem [resolvable:$true] %s53
      %59 = dma.hbm_to_vmem [thread:$0]  %s7, 4608, %s54, [#allocation6], 512, 512, 32
    $region33: #{tpu_custom_call.1} parent=1 // pred_fallthru
      _
    // Predicated region
    $region34: #{tpu_custom_call.1} parent=1 // pred_check
      _
    $region35: #{tpu_custom_call.1} parent=1 // pred_check_branch
      %61 = sbr.rel (0) target = $region37
    $region36: #{tpu_custom_call.1} parent=1 // pred_region
      %62 = dma.done [#allocation3], 64
    $region37: #{tpu_custom_call.1} parent=1 // pred_fallthru
      _
    // Predicated region
    $region38: #{tpu_custom_call.1} parent=1 // pred_check
      _
    $region39: #{tpu_custom_call.1} parent=1 // pred_check_branch
      %64 = sbr.rel (0) target = $region41
    $region40: #{tpu_custom_call.1} parent=1 // pred_region
      %65 = dma.done [#allocation6], 8192
    $region41: #{tpu_custom_call.1} parent=1 // pred_fallthru
      _
    // Predicated region
    $region42: #{tpu_custom_call.1} parent=1 // pred_check
      _
    $region43: #{tpu_custom_call.1} parent=1 // pred_check_branch
      %67 = sbr.rel (0) target = $region45
    $region44: #{tpu_custom_call.1} parent=1 // pred_region
      %68 = dma.done [#allocation6], 4608
    $region45: #{tpu_custom_call.1} parent=1 // pred_fallthru
      _
    %v69 = vld [vmem:[%s0] sm:$0xff]
    %v70 = vld [vmem:[%s0 + $0x8] sm:$0xff]
    %v71 = vld [vmem:[#allocation2] sm:$0xf]
    %v72 = vld [vmem:[%s2] sm:$0xff]
    %v75 = vcombine.high %v69, %v69
    %v76 = vcombine.high %v70, %v70
    %vm77 = vcmask 31744
    %v79 = vsel %vm77, %v72, 0
    %vm81 = vcmask 1043456
    %v82 = vsel %vm81, %v69, 0
    %v84 = vsel %vm81, %v75, 0
    %v86 = vsel %vm81, %v70, 0
    %v88 = vsel %vm81, %v76, 0
    %90 = vmatprep.subr.mxu0 %v84
    %91 = vmatpush1.msra.mxu0 %v82
    %92 = vmatprep.subr.mxu0 0.0
    %93 = vmatpush1.msra.mxu0 0.0
    %94 = vmatprep.subr.mxu0 0.0
    %95 = vmatpush1.msra.mxu0 0.0
    %96 = vmatprep.subr.mxu0 0.0
    %97 = vmatpush1.msra.mxu0 0.0
    %98 = vmatprep.subr.mxu0 0.0
    %99 = vmatpush1.msra.mxu0 0.0
    %100 = vmatprep.subr.mxu0 0.0
    %101 = vmatpush1.msra.mxu0 0.0
    %102 = vmatprep.subr.mxu0 0.0
    %103 = vmatpush1.msra.mxu0 0.0
    %104 = vmatprep.subr.mxu0 0.0
    %105 = vmatpush1.msra.mxu0 0.0
    %106 = vmatprep.subr.mxu0 0.0
    %107 = vmatpush1.msra.mxu0 0.0
    %108 = vmatprep.subr.mxu0 0.0
    %109 = vmatpush1.msra.mxu0 0.0
    %110 = vmatprep.subr.mxu0 0.0
    %111 = vmatpush1.msra.mxu0 0.0
    %112 = vmatprep.subr.mxu0 0.0
    %113 = vmatpush1.msra.mxu0 0.0
    %114 = vmatprep.subr.mxu0 0.0
    %115 = vmatpush1.msra.mxu0 0.0
    %116 = vmatprep.subr.mxu0 0.0
    %117 = vmatpush1.msra.mxu0 0.0
    %118 = vmatprep.subr.mxu0 0.0
    %119 = vmatpush1.msra.mxu0 0.0
    %120 = vmatprep.subr.mxu0 0.0
    %121 = vmatpush1.msra.mxu0 0.0
    %122 = vmatprep.subr.mxu0 0.0
    %123 = vmatpush1.msra.mxu0 0.0
    %124 = vmatprep.subr.mxu0 0.0
    %125 = vmatpush1.msra.mxu0 0.0
    %126 = vmatprep.subr.mxu0 0.0
    %127 = vmatpush1.msra.mxu0 0.0
    %128 = vmatprep.subr.mxu0 0.0
    %129 = vmatpush1.msra.mxu0 0.0
    %130 = vmatprep.subr.mxu0 0.0
    %131 = vmatpush1.msra.mxu0 0.0
    %132 = vmatprep.subr.mxu0 0.0
    %133 = vmatpush1.msra.mxu0 0.0
    %134 = vmatprep.subr.mxu0 0.0
    %135 = vmatpush1.msra.mxu0 0.0
    %136 = vmatprep.subr.mxu0 0.0
    %137 = vmatpush1.msra.mxu0 0.0
    %138 = vmatprep.subr.mxu0 0.0
    %139 = vmatpush1.msra.mxu0 0.0
    %140 = vmatprep.subr.mxu0 0.0
    %141 = vmatpush1.msra.mxu0 0.0
    %142 = vmatprep.subr.mxu0 0.0
    %143 = vmatpush1.msra.mxu0 0.0
    %144 = vmatprep.subr.mxu0 0.0
    %145 = vmatpush1.msra.mxu0 0.0
    %146 = vmatprep.subr.mxu0 0.0
    %147 = vmatpush1.msra.mxu0 0.0
    %148 = vmatprep.subr.mxu0 0.0
    %149 = vmatpush1.msra.mxu0 0.0
    %150 = vmatprep.subr.mxu0 0.0
    %151 = vmatpush1.msra.mxu0 0.0
    %152 = vmatprep.subr.mxu0 0.0
    %153 = vmatpush1.msra.mxu0 0.0
    %154 = vmatprep.mubr.f32.mxu0 0.0
    %155 = vmatmul.mubr.f32.gmra.mrb[0].mxu0 %v79
    %v156 = vpop.f32.mrb[0].mxu0
    %v157 = vadd.f32 0.0, %v156
    %v158 = vpop.f32.mrb[0].mxu0
    %v159 = vadd.f32 0.0, %v158
    %160 = vdwg.mxu0
    %161 = vmatprep.subr.mxu0 %v88
    %162 = vmatpush1.msra.mxu0 %v86
    %163 = vmatprep.subr.mxu0 0.0
    %164 = vmatpush1.msra.mxu0 0.0
    %165 = vmatprep.subr.mxu0 0.0
    %166 = vmatpush1.msra.mxu0 0.0
    %167 = vmatprep.subr.mxu0 0.0
    %168 = vmatpush1.msra.mxu0 0.0
    %169 = vmatprep.subr.mxu0 0.0
    %170 = vmatpush1.msra.mxu0 0.0
    %171 = vmatprep.subr.mxu0 0.0
    %172 = vmatpush1.msra.mxu0 0.0
    %173 = vmatprep.subr.mxu0 0.0
    %174 = vmatpush1.msra.mxu0 0.0
    %175 = vmatprep.subr.mxu0 0.0
    %176 = vmatpush1.msra.mxu0 0.0
    %177 = vmatprep.subr.mxu0 0.0
    %178 = vmatpush1.msra.mxu0 0.0
    %179 = vmatprep.subr.mxu0 0.0
    %180 = vmatpush1.msra.mxu0 0.0
    %181 = vmatprep.subr.mxu0 0.0
    %182 = vmatpush1.msra.mxu0 0.0
    %183 = vmatprep.subr.mxu0 0.0
    %184 = vmatpush1.msra.mxu0 0.0
    %185 = vmatprep.subr.mxu0 0.0
    %186 = vmatpush1.msra.mxu0 0.0
    %187 = vmatprep.subr.mxu0 0.0
    %188 = vmatpush1.msra.mxu0 0.0
    %189 = vmatprep.subr.mxu0 0.0
    %190 = vmatpush1.msra.mxu0 0.0
    %191 = vmatprep.subr.mxu0 0.0
    %192 = vmatpush1.msra.mxu0 0.0
    %193 = vmatprep.subr.mxu0 0.0
    %194 = vmatpush1.msra.mxu0 0.0
    %195 = vmatprep.subr.mxu0 0.0
    %196 = vmatpush1.msra.mxu0 0.0
    %197 = vmatprep.subr.mxu0 0.0
    %198 = vmatpush1.msra.mxu0 0.0
    %199 = vmatprep.subr.mxu0 0.0
    %200 = vmatpush1.msra.mxu0 0.0
    %201 = vmatprep.subr.mxu0 0.0
    %202 = vmatpush1.msra.mxu0 0.0
    %203 = vmatprep.subr.mxu0 0.0
    %204 = vmatpush1.msra.mxu0 0.0
    %205 = vmatprep.subr.mxu0 0.0
    %206 = vmatpush1.msra.mxu0 0.0
    %207 = vmatprep.subr.mxu0 0.0
    %208 = vmatpush1.msra.mxu0 0.0
    %209 = vmatprep.subr.mxu0 0.0
    %210 = vmatpush1.msra.mxu0 0.0
    %211 = vmatprep.subr.mxu0 0.0
    %212 = vmatpush1.msra.mxu0 0.0
    %213 = vmatprep.subr.mxu0 0.0
    %214 = vmatpush1.msra.mxu0 0.0
    %215 = vmatprep.subr.mxu0 0.0
    %216 = vmatpush1.msra.mxu0 0.0
    %217 = vmatprep.subr.mxu0 0.0
    %218 = vmatpush1.msra.mxu0 0.0
    %219 = vmatprep.subr.mxu0 0.0
    %220 = vmatpush1.msra.mxu0 0.0
    %221 = vmatprep.subr.mxu0 0.0
    %222 = vmatpush1.msra.mxu0 0.0
    %223 = vmatprep.subr.mxu0 0.0
    %224 = vmatpush1.msra.mxu0 0.0
    %225 = vmatprep.mubr.f32.mxu0 0.0
    %226 = vmatmul.mubr.f32.gmra.mrb[0].mxu0 %v79
    %v227 = vpop.f32.mrb[0].mxu0
    %v228 = vadd.f32 0.0, %v227
    %v229 = vpop.f32.mrb[0].mxu0
    %v230 = vadd.f32 0.0, %v229
    %231 = vdwg.mxu0
    %v232 = vld [vmem:[%s3] sm:$0xff]
    %v234 = vsel %vm77, %v232, 0
    %v237 = vsel %vm81, %v71, 0
    %239 = vmatprep.subr.mxu0 0.0
    %240 = vmatpush1.msra.mxu0 %v237
    %241 = vmatprep.subr.mxu0 0.0
    %242 = vmatpush1.msra.mxu0 0.0
    %243 = vmatprep.subr.mxu0 0.0
    %244 = vmatpush1.msra.mxu0 0.0
    %245 = vmatprep.subr.mxu0 0.0
    %246 = vmatpush1.msra.mxu0 0.0
    %247 = vmatprep.subr.mxu0 0.0
    %248 = vmatpush1.msra.mxu0 0.0
    %249 = vmatprep.subr.mxu0 0.0
    %250 = vmatpush1.msra.mxu0 0.0
    %251 = vmatprep.subr.mxu0 0.0
    %252 = vmatpush1.msra.mxu0 0.0
    %253 = vmatprep.subr.mxu0 0.0
    %254 = vmatpush1.msra.mxu0 0.0
    %255 = vmatprep.subr.mxu0 0.0
    %256 = vmatpush1.msra.mxu0 0.0
    %257 = vmatprep.subr.mxu0 0.0
    %258 = vmatpush1.msra.mxu0 0.0
    %259 = vmatprep.subr.mxu0 0.0
    %260 = vmatpush1.msra.mxu0 0.0
    %261 = vmatprep.subr.mxu0 0.0
    %262 = vmatpush1.msra.mxu0 0.0
    %263 = vmatprep.subr.mxu0 0.0
    %264 = vmatpush1.msra.mxu0 0.0
    %265 = vmatprep.subr.mxu0 0.0
    %266 = vmatpush1.msra.mxu0 0.0
    %267 = vmatprep.subr.mxu0 0.0
    %268 = vmatpush1.msra.mxu0 0.0
    %269 = vmatprep.subr.mxu0 0.0
    %270 = vmatpush1.msra.mxu0 0.0
    %271 = vmatprep.subr.mxu0 0.0
    %272 = vmatpush1.msra.mxu0 0.0
    %273 = vmatprep.subr.mxu0 0.0
    %274 = vmatpush1.msra.mxu0 0.0
    %275 = vmatprep.subr.mxu0 0.0
    %276 = vmatpush1.msra.mxu0 0.0
    %277 = vmatprep.subr.mxu0 0.0
    %278 = vmatpush1.msra.mxu0 0.0
    %279 = vmatprep.subr.mxu0 0.0
    %280 = vmatpush1.msra.mxu0 0.0
    %281 = vmatprep.subr.mxu0 0.0
    %282 = vmatpush1.msra.mxu0 0.0
    %283 = vmatprep.subr.mxu0 0.0
    %284 = vmatpush1.msra.mxu0 0.0
    %285 = vmatprep.subr.mxu0 0.0
    %286 = vmatpush1.msra.mxu0 0.0
    %287 = vmatprep.subr.mxu0 0.0
    %288 = vmatpush1.msra.mxu0 0.0
    %289 = vmatprep.subr.mxu0 0.0
    %290 = vmatpush1.msra.mxu0 0.0
    %291 = vmatprep.subr.mxu0 0.0
    %292 = vmatpush1.msra.mxu0 0.0
    %293 = vmatprep.subr.mxu0 0.0
    %294 = vmatpush1.msra.mxu0 0.0
    %295 = vmatprep.subr.mxu0 0.0
    %296 = vmatpush1.msra.mxu0 0.0
    %297 = vmatprep.subr.mxu0 0.0
    %298 = vmatpush1.msra.mxu0 0.0
    %299 = vmatprep.subr.mxu0 0.0
    %300 = vmatpush1.msra.mxu0 0.0
    %301 = vmatprep.subr.mxu0 0.0
    %302 = vmatpush1.msra.mxu0 0.0
    %303 = vmatprep.mubr.f32.mxu0 0.0
    %304 = vmatmul.mubr.f32.gmra.mrb[0].mxu0 %v234
    %v305 = vpop.f32.mrb[0].mxu0
    %v306 = vadd.f32 0.0, %v305
    %v307 = vpop.f32.mrb[0].mxu0
    %308 = vdwg.mxu0
    %v309 = vld [vmem:[#allocation5] sm:$0xff]
    %v310 = vld [vmem:[#allocation5 + $0x8] sm:$0xff]
    %v311 = vld [vmem:[#allocation5 + $0x10] sm:$0xff]
    %v312 = vld [vmem:[#allocation5 + $0x18] sm:$0xff]
    %v313 = vld [vmem:[#allocation5 + $0x20] sm:$0xff]
    %v314 = vld [vmem:[#allocation5 + $0x28] sm:$0xff]
    %v315 = vld [vmem:[#allocation5 + $0x30] sm:$0xff]
    %v316 = vld [vmem:[#allocation5 + $0x38] sm:$0xff]
    %v317 = vld [vmem:[#allocation5 + $0x40] sm:$0xff]
    %v318 = vld [vmem:[#allocation5 + $0x48] sm:$0xff]
    %v319 = vld [vmem:[#allocation5 + $0x50] sm:$0xff]
    %v320 = vld [vmem:[#allocation5 + $0x58] sm:$0xff]
    %v321 = vld [vmem:[#allocation5 + $0x60] sm:$0xff]
    %v322 = vld [vmem:[#allocation5 + $0x68] sm:$0xff]
    %v323 = vld [vmem:[#allocation5 + $0x70] sm:$0xff]
    %v324 = vld [vmem:[#allocation5 + $0x78] sm:$0xff]
    %v325 = vld [vmem:[#allocation5 + $0x80] sm:$0xff]
    %v326 = vld [vmem:[#allocation5 + $0x88] sm:$0xff]
    %v327 = vld [vmem:[#allocation5 + $0x90] sm:$0xff]
    %v328 = vld [vmem:[#allocation5 + $0x98] sm:$0xff]
    %v329 = vld [vmem:[#allocation5 + $0xa0] sm:$0xff]
    %v330 = vld [vmem:[#allocation5 + $0xa8] sm:$0xff]
    %v331 = vld [vmem:[#allocation5 + $0xb0] sm:$0xff]
    %v332 = vld [vmem:[#allocation5 + $0xb8] sm:$0xff]
    %v333 = vld [vmem:[#allocation5 + $0xc0] sm:$0xff]
    %v334 = vld [vmem:[#allocation5 + $0xc8] sm:$0xff]
    %v335 = vld [vmem:[#allocation5 + $0xd0] sm:$0xff]
    %v336 = vld [vmem:[#allocation5 + $0xd8] sm:$0xff]
    %v337 = vld [vmem:[#allocation5 + $0xe0] sm:$0xff]
    %v338 = vld [vmem:[#allocation5 + $0xe8] sm:$0xff]
    %v339 = vld [vmem:[#allocation5 + $0xf0] sm:$0xff]
    %v340 = vld [vmem:[#allocation5 + $0xf8] sm:$0xff]
    %v341 = vld [vmem:[#allocation5 + $0x100] sm:$0xff]
    %v342 = vld [vmem:[#allocation5 + $0x108] sm:$0xff]
    %v343 = vld [vmem:[#allocation5 + $0x110] sm:$0xff]
    %v344 = vld [vmem:[#allocation5 + $0x118] sm:$0xff]
    %v345 = vld [vmem:[#allocation5 + $0x120] sm:$0xff]
    %v346 = vld [vmem:[#allocation5 + $0x128] sm:$0xff]
    %v347 = vld [vmem:[#allocation5 + $0x130] sm:$0xff]
    %v348 = vld [vmem:[#allocation5 + $0x138] sm:$0xff]
    %v349 = vld [vmem:[#allocation5 + $0x140] sm:$0xff]
    %v350 = vld [vmem:[#allocation5 + $0x148] sm:$0xff]
    %v351 = vld [vmem:[#allocation5 + $0x150] sm:$0xff]
    %v352 = vld [vmem:[#allocation5 + $0x158] sm:$0xff]
    %v353 = vld [vmem:[#allocation5 + $0x160] sm:$0xff]
    %v354 = vld [vmem:[#allocation5 + $0x168] sm:$0xff]
    %v355 = vld [vmem:[#allocation5 + $0x170] sm:$0xff]
    %v356 = vld [vmem:[#allocation5 + $0x178] sm:$0xff]
    %v357 = vld [vmem:[#allocation5 + $0x180] sm:$0xff]
    %v358 = vld [vmem:[#allocation5 + $0x188] sm:$0xff]
    %v359 = vld [vmem:[#allocation5 + $0x190] sm:$0xff]
    %v360 = vld [vmem:[#allocation5 + $0x198] sm:$0xff]
    %v361 = vld [vmem:[#allocation5 + $0x1a0] sm:$0xff]
    %v362 = vld [vmem:[#allocation5 + $0x1a8] sm:$0xff]
    %v363 = vld [vmem:[#allocation5 + $0x1b0] sm:$0xff]
    %v364 = vld [vmem:[#allocation5 + $0x1b8] sm:$0xff]
    %v365 = vld [vmem:[#allocation5 + $0x1c0] sm:$0xff]
    %v366 = vld [vmem:[#allocation5 + $0x1c8] sm:$0xff]
    %v367 = vld [vmem:[#allocation5 + $0x1d0] sm:$0xff]
    %v368 = vld [vmem:[#allocation5 + $0x1d8] sm:$0xff]
    %v369 = vld [vmem:[#allocation5 + $0x1e0] sm:$0xff]
    %v370 = vld [vmem:[#allocation5 + $0x1e8] sm:$0xff]
    %v371 = vld [vmem:[#allocation5 + $0x1f0] sm:$0xff]
    %v372 = vld [vmem:[#allocation5 + $0x1f8] sm:$0xff]
    %373 = vmatprep.subr.mxu0 %v310
    %374 = vmatpush1.msra.mxu0 %v309
    %375 = vmatprep.subr.mxu0 %v314
    %376 = vmatpush1.msra.mxu0 %v313
    %377 = vmatprep.subr.mxu0 %v318
    %378 = vmatpush1.msra.mxu0 %v317
    %379 = vmatprep.subr.mxu0 %v322
    %380 = vmatpush1.msra.mxu0 %v321
    %381 = vmatprep.subr.mxu0 %v326
    %382 = vmatpush1.msra.mxu0 %v325
    %383 = vmatprep.subr.mxu0 %v330
    %384 = vmatpush1.msra.mxu0 %v329
    %385 = vmatprep.subr.mxu0 %v334
    %386 = vmatpush1.msra.mxu0 %v333
    %387 = vmatprep.subr.mxu0 %v338
    %388 = vmatpush1.msra.mxu0 %v337
    %389 = vmatprep.subr.mxu0 %v342
    %390 = vmatpush1.msra.mxu0 %v341
    %391 = vmatprep.subr.mxu0 %v346
    %392 = vmatpush1.msra.mxu0 %v345
    %393 = vmatprep.subr.mxu0 %v350
    %394 = vmatpush1.msra.mxu0 %v349
    %395 = vmatprep.subr.mxu0 %v354
    %396 = vmatpush1.msra.mxu0 %v353
    %397 = vmatprep.subr.mxu0 %v358
    %398 = vmatpush1.msra.mxu0 %v357
    %399 = vmatprep.subr.mxu0 %v362
    %400 = vmatpush1.msra.mxu0 %v361
    %401 = vmatprep.subr.mxu0 %v366
    %402 = vmatpush1.msra.mxu0 %v365
    %403 = vmatprep.subr.mxu0 %v370
    %404 = vmatpush1.msra.mxu0 %v369
    %405 = vmatprep.subr.mxu0 0.0
    %406 = vmatpush1.msra.mxu0 0.0
    %407 = vmatprep.subr.mxu0 0.0
    %408 = vmatpush1.msra.mxu0 0.0
    %409 = vmatprep.subr.mxu0 0.0
    %410 = vmatpush1.msra.mxu0 0.0
    %411 = vmatprep.subr.mxu0 0.0
    %412 = vmatpush1.msra.mxu0 0.0
    %413 = vmatprep.subr.mxu0 0.0
    %414 = vmatpush1.msra.mxu0 0.0
    %415 = vmatprep.subr.mxu0 0.0
    %416 = vmatpush1.msra.mxu0 0.0
    %417 = vmatprep.subr.mxu0 0.0
    %418 = vmatpush1.msra.mxu0 0.0
    %419 = vmatprep.subr.mxu0 0.0
    %420 = vmatpush1.msra.mxu0 0.0
    %421 = vmatprep.subr.mxu0 0.0
    %422 = vmatpush1.msra.mxu0 0.0
    %423 = vmatprep.subr.mxu0 0.0
    %424 = vmatpush1.msra.mxu0 0.0
    %425 = vmatprep.subr.mxu0 0.0
    %426 = vmatpush1.msra.mxu0 0.0
    %427 = vmatprep.subr.mxu0 0.0
    %428 = vmatpush1.msra.mxu0 0.0
    %429 = vmatprep.subr.mxu0 0.0
    %430 = vmatpush1.msra.mxu0 0.0
    %431 = vmatprep.subr.mxu0 0.0
    %432 = vmatpush1.msra.mxu0 0.0
    %433 = vmatprep.subr.mxu0 0.0
    %434 = vmatpush1.msra.mxu0 0.0
    %435 = vmatprep.subr.mxu0 0.0
    %436 = vmatpush1.msra.mxu0 0.0
    %437 = vmatprep.mubr.f32.mxu0 0.0
    %438 = vmatmul.mubr.f32.gmra.mrb[0].mxu0 %v306
    %v439 = vpop.f32.mrb[0].mxu0
    %v440 = vadd.f32 %v157, %v439
    %v441 = vpop.f32.mrb[0].mxu0
    %v442 = vadd.f32 %v159, %v441
    %443 = vdwg.mxu0
    %444 = vmatprep.subr.mxu0 %v312
    %445 = vmatpush1.msra.mxu0 %v311
    %446 = vmatprep.subr.mxu0 %v316
    %447 = vmatpush1.msra.mxu0 %v315
    %448 = vmatprep.subr.mxu0 %v320
    %449 = vmatpush1.msra.mxu0 %v319
    %450 = vmatprep.subr.mxu0 %v324
    %451 = vmatpush1.msra.mxu0 %v323
    %452 = vmatprep.subr.mxu0 %v328
    %453 = vmatpush1.msra.mxu0 %v327
    %454 = vmatprep.subr.mxu0 %v332
    %455 = vmatpush1.msra.mxu0 %v331
    %456 = vmatprep.subr.mxu0 %v336
    %457 = vmatpush1.msra.mxu0 %v335
    %458 = vmatprep.subr.mxu0 %v340
    %459 = vmatpush1.msra.mxu0 %v339
    %460 = vmatprep.subr.mxu0 %v344
    %461 = vmatpush1.msra.mxu0 %v343
    %462 = vmatprep.subr.mxu0 %v348
    %463 = vmatpush1.msra.mxu0 %v347
    %464 = vmatprep.subr.mxu0 %v352
    %465 = vmatpush1.msra.mxu0 %v351
    %466 = vmatprep.subr.mxu0 %v356
    %467 = vmatpush1.msra.mxu0 %v355
    %468 = vmatprep.subr.mxu0 %v360
    %469 = vmatpush1.msra.mxu0 %v359
    %470 = vmatprep.subr.mxu0 %v364
    %471 = vmatpush1.msra.mxu0 %v363
    %472 = vmatprep.subr.mxu0 %v368
    %473 = vmatpush1.msra.mxu0 %v367
    %474 = vmatprep.subr.mxu0 %v372
    %475 = vmatpush1.msra.mxu0 %v371
    %476 = vmatprep.subr.mxu0 0.0
    %477 = vmatpush1.msra.mxu0 0.0
    %478 = vmatprep.subr.mxu0 0.0
    %479 = vmatpush1.msra.mxu0 0.0
    %480 = vmatprep.subr.mxu0 0.0
    %481 = vmatpush1.msra.mxu0 0.0
    %482 = vmatprep.subr.mxu0 0.0
    %483 = vmatpush1.msra.mxu0 0.0
    %484 = vmatprep.subr.mxu0 0.0
    %485 = vmatpush1.msra.mxu0 0.0
    %486 = vmatprep.subr.mxu0 0.0
    %487 = vmatpush1.msra.mxu0 0.0
    %488 = vmatprep.subr.mxu0 0.0
    %489 = vmatpush1.msra.mxu0 0.0
    %490 = vmatprep.subr.mxu0 0.0
    %491 = vmatpush1.msra.mxu0 0.0
    %492 = vmatprep.subr.mxu0 0.0
    %493 = vmatpush1.msra.mxu0 0.0
    %494 = vmatprep.subr.mxu0 0.0
    %495 = vmatpush1.msra.mxu0 0.0
    %496 = vmatprep.subr.mxu0 0.0
    %497 = vmatpush1.msra.mxu0 0.0
    %498 = vmatprep.subr.mxu0 0.0
    %499 = vmatpush1.msra.mxu0 0.0
    %500 = vmatprep.subr.mxu0 0.0
    %501 = vmatpush1.msra.mxu0 0.0
    %502 = vmatprep.subr.mxu0 0.0
    %503 = vmatpush1.msra.mxu0 0.0
    %504 = vmatprep.subr.mxu0 0.0
    %505 = vmatpush1.msra.mxu0 0.0
    %506 = vmatprep.subr.mxu0 0.0
    %507 = vmatpush1.msra.mxu0 0.0
    %508 = vmatprep.mubr.f32.mxu0 0.0
    %509 = vmatmul.mubr.f32.gmra.mrb[0].mxu0 %v306
    %v510 = vpop.f32.mrb[0].mxu0
    %v511 = vadd.f32 %v228, %v510
    %v512 = vpop.f32.mrb[0].mxu0
    %v513 = vadd.f32 %v230, %v512
    %514 = vdwg.mxu0
    %515 = vrot.lane.b32.xlu0 %v440, 17
    %v516 = vpop.permute.xlu0 %515
    %517 = vrot.lane.b32.xlu0 %v442, 17
    %v518 = vpop.permute.xlu0 %517
    %519 = vrot.lane.b32.xlu0 %v511, 17
    %v520 = vpop.permute.xlu0 %519
    %521 = vrot.lane.b32.xlu0 %v513, 17
    %v522 = vpop.permute.xlu0 %521
    %v523 = vlaneseq
    %v524 = vand.u32 %v523, 127
    %vm525 = vcmp.lt.s32.totalorder %v524, 17
    %v526 = vsel %vm525, %v520, %v522
    %v527 = vsel %vm525, %v518, %v520
    %v528 = vsel %vm525, %v516, %v518
    %v529 = vsel %vm525, %v522, %v516
    %530 = vrot.lane.b32.xlu0 %v440, 16
    %v531 = vpop.permute.xlu0 %530
    %532 = vrot.lane.b32.xlu0 %v442, 16
    %v533 = vpop.permute.xlu0 %532
    %534 = vrot.lane.b32.xlu0 %v511, 16
    %v535 = vpop.permute.xlu0 %534
    %536 = vrot.lane.b32.xlu0 %v513, 16
    %v537 = vpop.permute.xlu0 %536
    %vm538 = vcmp.lt.s32.totalorder %v524, 16
    %v539 = vsel %vm538, %v535, %v537
    %v540 = vsel %vm538, %v533, %v535
    %v541 = vsel %vm538, %v531, %v533
    %v542 = vsel %vm538, %v537, %v531
    %543 = vrot.lane.b32.xlu0 %v440, 15
    %v544 = vpop.permute.xlu0 %543
    %545 = vrot.lane.b32.xlu0 %v442, 15
    %v546 = vpop.permute.xlu0 %545
    %547 = vrot.lane.b32.xlu0 %v511, 15
    %v548 = vpop.permute.xlu0 %547
    %549 = vrot.lane.b32.xlu0 %v513, 15
    %v550 = vpop.permute.xlu0 %549
    %vm551 = vcmp.lt.s32.totalorder %v524, 15
    %v552 = vsel %vm551, %v548, %v550
    %v553 = vsel %vm551, %v546, %v548
    %v554 = vsel %vm551, %v544, %v546
    %v555 = vsel %vm551, %v550, %v544
    %556 = vrot.lane.b32.xlu0 %v440, 1
    %v557 = vpop.permute.xlu0 %556
    %558 = vrot.lane.b32.xlu0 %v442, 1
    %v559 = vpop.permute.xlu0 %558
    %560 = vrot.lane.b32.xlu0 %v511, 1
    %v561 = vpop.permute.xlu0 %560
    %562 = vrot.lane.b32.xlu0 %v513, 1
    %v563 = vpop.permute.xlu0 %562
    %vm564 = vcmp.lt.s32.totalorder %v524, 1
    %v565 = vsel %vm564, %v561, %v563
    %v566 = vsel %vm564, %v559, %v561
    %v567 = vsel %vm564, %v557, %v559
    %v568 = vsel %vm564, %v563, %v557
    %569 = vrot.lane.b32.xlu0 %v440, 127
    %v570 = vpop.permute.xlu0 %569
    %571 = vrot.lane.b32.xlu0 %v442, 127
    %v572 = vpop.permute.xlu0 %571
    %573 = vrot.lane.b32.xlu0 %v511, 127
    %v574 = vpop.permute.xlu0 %573
    %575 = vrot.lane.b32.xlu0 %v513, 127
    %v576 = vpop.permute.xlu0 %575
    %vm577 = vcmp.lt.s32.totalorder %v524, 127
    %v578 = vsel %vm577, %v574, %v576
    %v579 = vsel %vm577, %v572, %v574
    %v580 = vsel %vm577, %v570, %v572
    %v581 = vsel %vm577, %v576, %v570
    %582 = vrot.lane.b32.xlu0 %v440, 113
    %v583 = vpop.permute.xlu0 %582
    %584 = vrot.lane.b32.xlu0 %v442, 113
    %v585 = vpop.permute.xlu0 %584
    %586 = vrot.lane.b32.xlu0 %v511, 113
    %v587 = vpop.permute.xlu0 %586
    %588 = vrot.lane.b32.xlu0 %v513, 113
    %v589 = vpop.permute.xlu0 %588
    %vm590 = vcmp.lt.s32.totalorder %v524, 113
    %v591 = vsel %vm590, %v587, %v589
    %v592 = vsel %vm590, %v585, %v587
    %v593 = vsel %vm590, %v583, %v585
    %v594 = vsel %vm590, %v589, %v583
    %595 = vrot.lane.b32.xlu0 %v440, 112
    %v596 = vpop.permute.xlu0 %595
    %597 = vrot.lane.b32.xlu0 %v442, 112
    %v598 = vpop.permute.xlu0 %597
    %599 = vrot.lane.b32.xlu0 %v511, 112
    %v600 = vpop.permute.xlu0 %599
    %601 = vrot.lane.b32.xlu0 %v513, 112
    %v602 = vpop.permute.xlu0 %601
    %vm603 = vcmp.lt.s32.totalorder %v524, 112
    %v604 = vsel %vm603, %v600, %v602
    %v605 = vsel %vm603, %v598, %v600
    %v606 = vsel %vm603, %v596, %v598
    %v607 = vsel %vm603, %v602, %v596
    %608 = vrot.lane.b32.xlu0 %v440, 111
    %v609 = vpop.permute.xlu0 %608
    %610 = vrot.lane.b32.xlu0 %v442, 111
    %v611 = vpop.permute.xlu0 %610
    %612 = vrot.lane.b32.xlu0 %v511, 111
    %v613 = vpop.permute.xlu0 %612
    %614 = vrot.lane.b32.xlu0 %v513, 111
    %v615 = vpop.permute.xlu0 %614
    %vm616 = vcmp.lt.s32.totalorder %v524, 111
    %v617 = vsel %vm616, %v613, %v615
    %v618 = vsel %vm616, %v611, %v613
    %v619 = vsel %vm616, %v609, %v611
    %v620 = vsel %vm616, %v615, %v609
    %v621 = vld [vmem:[#allocation7] sm:$0xff]
    %v622 = vld [vmem:[#allocation7 + $0x8] sm:$0xff]
    %v623 = vld [vmem:[#allocation7 + $0x10] sm:$0xff]
    %v624 = vld [vmem:[#allocation7 + $0x18] sm:$0xff]
    %v625 = vld [vmem:[#allocation7 + $0x20] sm:$0xff]
    %v626 = vld [vmem:[#allocation7 + $0x28] sm:$0xff]
    %v627 = vld [vmem:[#allocation7 + $0x30] sm:$0xff]
    %v628 = vld [vmem:[#allocation7 + $0x38] sm:$0xff]
    %v629 = vld [vmem:[#allocation7 + $0x40] sm:$0xff]
    %v630 = vld [vmem:[#allocation7 + $0x48] sm:$0xff]
    %v631 = vld [vmem:[#allocation7 + $0x50] sm:$0xff]
    %v632 = vld [vmem:[#allocation7 + $0x58] sm:$0xff]
    %v633 = vld [vmem:[#allocation7 + $0x60] sm:$0xff]
    %v634 = vld [vmem:[#allocation7 + $0x68] sm:$0xff]
    %v635 = vld [vmem:[#allocation7 + $0x70] sm:$0xff]
    %v636 = vld [vmem:[#allocation7 + $0x78] sm:$0xff]
    %v637 = vld [vmem:[#allocation7 + $0x80] sm:$0xff]
    %v638 = vld [vmem:[#allocation7 + $0x88] sm:$0xff]
    %v639 = vld [vmem:[#allocation7 + $0x90] sm:$0xff]
    %v640 = vld [vmem:[#allocation7 + $0x98] sm:$0xff]
    %v641 = vld [vmem:[#allocation7 + $0xa0] sm:$0xff]
    %v642 = vld [vmem:[#allocation7 + $0xa8] sm:$0xff]
    %v643 = vld [vmem:[#allocation7 + $0xb0] sm:$0xff]
    %v644 = vld [vmem:[#allocation7 + $0xb8] sm:$0xff]
    %v645 = vld [vmem:[#allocation7 + $0xc0] sm:$0xff]
    %v646 = vld [vmem:[#allocation7 + $0xc8] sm:$0xff]
    %v647 = vld [vmem:[#allocation7 + $0xd0] sm:$0xff]
    %v648 = vld [vmem:[#allocation7 + $0xd8] sm:$0xff]
    %v649 = vld [vmem:[#allocation7 + $0xe0] sm:$0xff]
    %v650 = vld [vmem:[#allocation7 + $0xe8] sm:$0xff]
    %v651 = vld [vmem:[#allocation7 + $0xf0] sm:$0xff]
    %v652 = vld [vmem:[#allocation7 + $0xf8] sm:$0xff]
    %v653 = vld [vmem:[#allocation7 + $0x100] sm:$0xff]
    %v654 = vld [vmem:[#allocation7 + $0x108] sm:$0xff]
    %v655 = vld [vmem:[#allocation7 + $0x110] sm:$0xff]
    %v656 = vld [vmem:[#allocation7 + $0x118] sm:$0xff]
    %v657 = vmul.f32 %v529, %v621
    %v658 = vmul.f32 %v528, %v622
    %v659 = vmul.f32 %v527, %v623
    %v660 = vmul.f32 %v526, %v624
    %v661 = vmul.f32 %v542, %v625
    %v662 = vmul.f32 %v541, %v626
    %v663 = vmul.f32 %v540, %v627
    %v664 = vmul.f32 %v539, %v628
    %v665 = vmul.f32 %v555, %v629
    %v666 = vmul.f32 %v554, %v630
    %v667 = vmul.f32 %v553, %v631
    %v668 = vmul.f32 %v552, %v632
    %v669 = vmul.f32 %v568, %v633
    %v670 = vmul.f32 %v567, %v634
    %v671 = vmul.f32 %v566, %v635
    %v672 = vmul.f32 %v565, %v636
    %v673 = vmul.f32 %v440, %v637
    %v674 = vmul.f32 %v442, %v638
    %v675 = vmul.f32 %v511, %v639
    %v676 = vmul.f32 %v513, %v640
    %v677 = vmul.f32 %v580, %v641
    %v678 = vmul.f32 %v579, %v642
    %v679 = vmul.f32 %v578, %v643
    %v680 = vmul.f32 %v581, %v644
    %v681 = vmul.f32 %v593, %v645
    %v682 = vmul.f32 %v592, %v646
    %v683 = vmul.f32 %v591, %v647
    %v684 = vmul.f32 %v594, %v648
    %v685 = vmul.f32 %v606, %v649
    %v686 = vmul.f32 %v605, %v650
    %v687 = vmul.f32 %v604, %v651
    %v688 = vmul.f32 %v607, %v652
    %v689 = vmul.f32 %v619, %v653
    %v690 = vmul.f32 %v618, %v654
    %v691 = vmul.f32 %v617, %v655
    %v692 = vmul.f32 %v620, %v656
    %v693 = vld [vmem:[%s4] sm:$0x3]
    %vm694 = vcmask 588800
    %v696 = vsel %vm694, %v693, 0
    %698 = vmatprep.subr.mxu0 %v658
    %699 = vmatpush1.msra.mxu0 %v657
    %700 = vmatprep.subr.mxu0 %v662
    %701 = vmatpush1.msra.mxu0 %v661
    %702 = vmatprep.subr.mxu0 %v666
    %703 = vmatpush1.msra.mxu0 %v665
    %704 = vmatprep.subr.mxu0 %v670
    %705 = vmatpush1.msra.mxu0 %v669
    %706 = vmatprep.subr.mxu0 %v674
    %707 = vmatpush1.msra.mxu0 %v673
    %708 = vmatprep.subr.mxu0 %v678
    %709 = vmatpush1.msra.mxu0 %v677
    %710 = vmatprep.subr.mxu0 %v682
    %711 = vmatpush1.msra.mxu0 %v681
    %712 = vmatprep.subr.mxu0 %v686
    %713 = vmatpush1.msra.mxu0 %v685
    %714 = vmatprep.subr.mxu0 %v690
    %715 = vmatpush1.msra.mxu0 %v689
    %716 = vmatprep.subr.mxu0 0.0
    %717 = vmatpush1.msra.mxu0 0.0
    %718 = vmatprep.subr.mxu0 0.0
    %719 = vmatpush1.msra.mxu0 0.0
    %720 = vmatprep.subr.mxu0 0.0
    %721 = vmatpush1.msra.mxu0 0.0
    %722 = vmatprep.subr.mxu0 0.0
    %723 = vmatpush1.msra.mxu0 0.0
    %724 = vmatprep.subr.mxu0 0.0
    %725 = vmatpush1.msra.mxu0 0.0
    %726 = vmatprep.subr.mxu0 0.0
    %727 = vmatpush1.msra.mxu0 0.0
    %728 = vmatprep.subr.mxu0 0.0
    %729 = vmatpush1.msra.mxu0 0.0
    %730 = vmatprep.subr.mxu0 0.0
    %731 = vmatpush1.msra.mxu0 0.0
    %732 = vmatprep.subr.mxu0 0.0
    %733 = vmatpush1.msra.mxu0 0.0
    %734 = vmatprep.subr.mxu0 0.0
    %735 = vmatpush1.msra.mxu0 0.0
    %736 = vmatprep.subr.mxu0 0.0
    %737 = vmatpush1.msra.mxu0 0.0
    %738 = vmatprep.subr.mxu0 0.0
    %739 = vmatpush1.msra.mxu0 0.0
    %740 = vmatprep.subr.mxu0 0.0
    %741 = vmatpush1.msra.mxu0 0.0
    %742 = vmatprep.subr.mxu0 0.0
    %743 = vmatpush1.msra.mxu0 0.0
    %744 = vmatprep.subr.mxu0 0.0
    %745 = vmatpush1.msra.mxu0 0.0
    %746 = vmatprep.subr.mxu0 0.0
    %747 = vmatpush1.msra.mxu0 0.0
    %748 = vmatprep.subr.mxu0 0.0
    %749 = vmatpush1.msra.mxu0 0.0
    %750 = vmatprep.subr.mxu0 0.0
    %751 = vmatpush1.msra.mxu0 0.0
    %752 = vmatprep.subr.mxu0 0.0
    %753 = vmatpush1.msra.mxu0 0.0
    %754 = vmatprep.subr.mxu0 0.0
    %755 = vmatpush1.msra.mxu0 0.0
    %756 = vmatprep.subr.mxu0 0.0
    %757 = vmatpush1.msra.mxu0 0.0
    %758 = vmatprep.subr.mxu0 0.0
    %759 = vmatpush1.msra.mxu0 0.0
    %760 = vmatprep.subr.mxu0 0.0
    %761 = vmatpush1.msra.mxu0 0.0
    %762 = vmatprep.mubr.f32.mxu0 0.0
    %763 = vmatmul.mubr.f32.gmra.mrb[0].mxu0 %v696
    %v764 = vpop.f32.mrb[0].mxu0
    %v765 = vadd.f32 0.0, %v764
    %v766 = vpop.f32.mrb[0].mxu0
    %v767 = vadd.f32 0.0, %v766
    %768 = vdwg.mxu0
    %769 = vmatprep.subr.mxu0 %v660
    %770 = vmatpush1.msra.mxu0 %v659
    %771 = vmatprep.subr.mxu0 %v664
    %772 = vmatpush1.msra.mxu0 %v663
    %773 = vmatprep.subr.mxu0 %v668
    %774 = vmatpush1.msra.mxu0 %v667
    %775 = vmatprep.subr.mxu0 %v672
    %776 = vmatpush1.msra.mxu0 %v671
    %777 = vmatprep.subr.mxu0 %v676
    %778 = vmatpush1.msra.mxu0 %v675
    %779 = vmatprep.subr.mxu0 %v680
    %780 = vmatpush1.msra.mxu0 %v679
    %781 = vmatprep.subr.mxu0 %v684
    %782 = vmatpush1.msra.mxu0 %v683
    %783 = vmatprep.subr.mxu0 %v688
    %784 = vmatpush1.msra.mxu0 %v687
    %785 = vmatprep.subr.mxu0 %v692
    %786 = vmatpush1.msra.mxu0 %v691
    %787 = vmatprep.subr.mxu0 0.0
    %788 = vmatpush1.msra.mxu0 0.0
    %789 = vmatprep.subr.mxu0 0.0
    %790 = vmatpush1.msra.mxu0 0.0
    %791 = vmatprep.subr.mxu0 0.0
    %792 = vmatpush1.msra.mxu0 0.0
    %793 = vmatprep.subr.mxu0 0.0
    %794 = vmatpush1.msra.mxu0 0.0
    %795 = vmatprep.subr.mxu0 0.0
    %796 = vmatpush1.msra.mxu0 0.0
    %797 = vmatprep.subr.mxu0 0.0
    %798 = vmatpush1.msra.mxu0 0.0
    %799 = vmatprep.subr.mxu0 0.0
    %800 = vmatpush1.msra.mxu0 0.0
    %801 = vmatprep.subr.mxu0 0.0
    %802 = vmatpush1.msra.mxu0 0.0
    %803 = vmatprep.subr.mxu0 0.0
    %804 = vmatpush1.msra.mxu0 0.0
    %805 = vmatprep.subr.mxu0 0.0
    %806 = vmatpush1.msra.mxu0 0.0
    %807 = vmatprep.subr.mxu0 0.0
    %808 = vmatpush1.msra.mxu0 0.0
    %809 = vmatprep.subr.mxu0 0.0
    %810 = vmatpush1.msra.mxu0 0.0
    %811 = vmatprep.subr.mxu0 0.0
    %812 = vmatpush1.msra.mxu0 0.0
    %813 = vmatprep.subr.mxu0 0.0
    %814 = vmatpush1.msra.mxu0 0.0
    %815 = vmatprep.subr.mxu0 0.0
    %816 = vmatpush1.msra.mxu0 0.0
    %817 = vmatprep.subr.mxu0 0.0
    %818 = vmatpush1.msra.mxu0 0.0
    %819 = vmatprep.subr.mxu0 0.0
    %820 = vmatpush1.msra.mxu0 0.0
    %821 = vmatprep.subr.mxu0 0.0
    %822 = vmatpush1.msra.mxu0 0.0
    %823 = vmatprep.subr.mxu0 0.0
    %824 = vmatpush1.msra.mxu0 0.0
    %825 = vmatprep.subr.mxu0 0.0
    %826 = vmatpush1.msra.mxu0 0.0
    %827 = vmatprep.subr.mxu0 0.0
    %828 = vmatpush1.msra.mxu0 0.0
    %829 = vmatprep.subr.mxu0 0.0
    %830 = vmatpush1.msra.mxu0 0.0
    %831 = vmatprep.subr.mxu0 0.0
    %832 = vmatpush1.msra.mxu0 0.0
    %833 = vmatprep.mubr.f32.mxu0 0.0
    %834 = vmatmul.mubr.f32.gmra.mrb[0].mxu0 %v696
    %v835 = vpop.f32.mrb[0].mxu0
    %v836 = vadd.f32 0.0, %v835
    %v837 = vpop.f32.mrb[0].mxu0
    %v838 = vadd.f32 0.0, %v837
    %839 = vdwg.mxu0
    %v840 = vld [vmem:[%s6] sm:$0x77]
    %v841 = vld [vmem:[%s6 + $0x8] sm:$0x77]
    %v842 = vmul.f32 %v765, 0.0625
    %v843 = vmul.f32 %v767, 0.0625
    %v844 = vmul.f32 %v836, 0.0625
    %v845 = vmul.f32 %v838, 0.0625
    %v850 = vcombine.low %v842, %v843
    %v851 = vcombine.low %v844, %v845
    %v854 = vadd.f32 %v840, %v850
    %v855 = vadd.f32 %v841, %v851
    %v856 = vcvt.f32.s32.to.zero.pseudo %v840
    %v857 = vcvt.f32.s32.to.zero.pseudo %v841
    %v858 = vadd.f32 %v854, 1.0
    %v859 = vadd.f32 %v855, 1.0
    %v860 = vmul.f32 %v858, 4.0
    %v861 = vmul.f32 %v859, 4.0
    %v862 = vsub.f32 %v860, 0.5
    %v863 = vsub.f32 %v861, 0.5
    %v864 = vfloor.f32 %v862
    %v865 = vfloor.f32 %v863
    %v866 = vcvt.f32.s32.to.zero.pseudo %v864
    %v867 = vcvt.f32.s32.to.zero.pseudo %v865
    %v868 = vadd.s32 %v866, 1
    %v869 = vadd.s32 %v867, 1
    %v870 = vsub.f32 %v862, %v864
    %v871 = vsub.f32 %v863, %v865
    %v872 = vsub.f32 1.0, %v870
    %v873 = vsub.f32 1.0, %v871
    %vm874 = vcmp.ge.s32.totalorder %v866, 0
    %vm875 = vcmp.ge.s32.totalorder %v867, 0
    %vm876 = vcmp.lt.s32.totalorder %v866, 8
    %vm877 = vcmp.lt.s32.totalorder %v867, 8
    %vm878 = vmand %vm874, %vm876
    %vm879 = vmand %vm875, %vm877
    %v880 = vsel %vm878, 1, 0
    %v881 = vsel %vm879, 1, 0
    %v882 = vcvt.s32.f32 %v880
    %v883 = vcvt.s32.f32 %v881
    %vm884 = vcmp.ge.s32.totalorder %v868, 0
    %vm885 = vcmp.ge.s32.totalorder %v869, 0
    %vm886 = vcmp.lt.s32.totalorder %v868, 8
    %vm887 = vcmp.lt.s32.totalorder %v869, 8
    %vm888 = vmand %vm884, %vm886
    %vm889 = vmand %vm885, %vm887
    %v890 = vsel %vm888, 1, 0
    %v891 = vsel %vm889, 1, 0
    %v892 = vcvt.s32.f32 %v890
    %v893 = vcvt.s32.f32 %v891
    %v894 = vrot.slane %v856, 5
    %v895 = vrot.slane %v894, 4
    %v896 = vrot.slane %v857, 5
    %v897 = vrot.slane %v896, 4
    %v898 = vadd.s32 %v866, %v895
    %v899 = vadd.s32 %v867, %v897
    %v900 = vadd.s32 %v868, %v895
    %v901 = vadd.s32 %v869, %v897
    %v902 = vlaneseq
    %v903 = vshrl.u32 %v902, 7
    %v904 = vadd.s32 %v903, 8
    %v905 = vadd.s32 %v903, 16
    %v906 = vadd.s32 %v903, 24
    %v907 = vadd.s32 %v903, 32
    %v908 = vadd.s32 %v903, 40
    %v909 = vadd.s32 %v903, 48
    %v910 = vadd.s32 %v903, 56
    %v911 = vadd.s32 %v903, 64
    %v912 = vadd.s32 %v903, 72
    %v913 = vadd.s32 %v903, 80
    %v914 = vadd.s32 %v903, 88
    %v915 = vadd.s32 %v903, 96
    %v916 = vadd.s32 %v903, 104
    %v917 = vadd.s32 %v903, 112
    %v918 = vadd.s32 %v903, 120
    %v919 = vand.u32 %v903, 7
    %v920 = vand.u32 %v904, 7
    %v921 = vand.u32 %v905, 7
    %v922 = vand.u32 %v906, 7
    %v923 = vand.u32 %v907, 7
    %v924 = vand.u32 %v908, 7
    %v925 = vand.u32 %v909, 7
    %v926 = vand.u32 %v910, 7
    %v927 = vand.u32 %v911, 7
    %v928 = vand.u32 %v912, 7
    %v929 = vand.u32 %v913, 7
    %v930 = vand.u32 %v914, 7
    %v931 = vand.u32 %v915, 7
    %v932 = vand.u32 %v916, 7
    %v933 = vand.u32 %v917, 7
    %v934 = vand.u32 %v918, 7
    %v935 = vshra.s32 %v903, 3
    %v936 = vshra.s32 %v904, 3
    %v937 = vshra.s32 %v905, 3
    %v938 = vshra.s32 %v906, 3
    %v939 = vshra.s32 %v907, 3
    %v940 = vshra.s32 %v908, 3
    %v941 = vshra.s32 %v909, 3
    %v942 = vshra.s32 %v910, 3
    %v943 = vshra.s32 %v911, 3
    %v944 = vshra.s32 %v912, 3
    %v945 = vshra.s32 %v913, 3
    %v946 = vshra.s32 %v914, 3
    %v947 = vshra.s32 %v915, 3
    %v948 = vshra.s32 %v916, 3
    %v949 = vshra.s32 %v917, 3
    %v950 = vshra.s32 %v918, 3
    %v951 = vlaneseq
    %v952 = vshrl.u32 %v951, 7
    %v953 = vsub.s32 0, %v952
    %v954 = vrot.slane %v866, %v953
    %v955 = vlaneseq
    %v956 = vshrl.u32 %v955, 7
    %v957 = vsub.s32 4, %v956
    %v958 = vrot.slane %v866, %v957
    %v959 = vlaneseq
    %v960 = vshrl.u32 %v959, 7
    %v961 = vsub.s32 0, %v960
    %v962 = vrot.slane %v867, %v961
    %v963 = vlaneseq
    %v964 = vshrl.u32 %v963, 7
    %v965 = vsub.s32 4, %v964
    %v966 = vrot.slane %v867, %v965
    %v967 = vlaneseq
    %v968 = vshrl.u32 %v967, 7
    %v969 = vsub.s32 0, %v968
    %v970 = vrot.slane %v954, %v969
    %v971 = vlaneseq
    %v972 = vshrl.u32 %v971, 7
    %v973 = vsub.s32 0, %v972
    %v974 = vrot.slane %v958, %v973
    %v975 = vlaneseq
    %v976 = vshrl.u32 %v975, 7
    %v977 = vsub.s32 0, %v976
    %v978 = vrot.slane %v962, %v977
    %v979 = vlaneseq
    %v980 = vshrl.u32 %v979, 7
    %v981 = vsub.s32 0, %v980
    %v982 = vrot.slane %v966, %v981
    %vm983 = vcmp.eq.s32.totalorder %v919, %v970
    %vm984 = vcmp.eq.s32.totalorder %v919, %v974
    %vm985 = vcmp.eq.s32.totalorder %v919, %v978
    %vm986 = vcmp.eq.s32.totalorder %v919, %v982
    %vm987 = vcmp.eq.s32.totalorder %v920, %v970
    %vm988 = vcmp.eq.s32.totalorder %v920, %v974
    %vm989 = vcmp.eq.s32.totalorder %v920, %v978
    %vm990 = vcmp.eq.s32.totalorder %v920, %v982
    %vm991 = vcmp.eq.s32.totalorder %v921, %v970
    %vm992 = vcmp.eq.s32.totalorder %v921, %v974
    %vm993 = vcmp.eq.s32.totalorder %v921, %v978
    %vm994 = vcmp.eq.s32.totalorder %v921, %v982
    %vm995 = vcmp.eq.s32.totalorder %v922, %v970
    %vm996 = vcmp.eq.s32.totalorder %v922, %v974
    %vm997 = vcmp.eq.s32.totalorder %v922, %v978
    %vm998 = vcmp.eq.s32.totalorder %v922, %v982
    %vm999 = vcmp.eq.s32.totalorder %v923, %v970
    %vm1000 = vcmp.eq.s32.totalorder %v923, %v974
    %vm1001 = vcmp.eq.s32.totalorder %v923, %v978
    %vm1002 = vcmp.eq.s32.totalorder %v923, %v982
    %vm1003 = vcmp.eq.s32.totalorder %v924, %v970
    %vm1004 = vcmp.eq.s32.totalorder %v924, %v974
    %vm1005 = vcmp.eq.s32.totalorder %v924, %v978
    %vm1006 = vcmp.eq.s32.totalorder %v924, %v982
    %vm1007 = vcmp.eq.s32.totalorder %v925, %v970
    %vm1008 = vcmp.eq.s32.totalorder %v925, %v974
    %vm1009 = vcmp.eq.s32.totalorder %v925, %v978
    %vm1010 = vcmp.eq.s32.totalorder %v925, %v982
    %vm1011 = vcmp.eq.s32.totalorder %v926, %v970
    %vm1012 = vcmp.eq.s32.totalorder %v926, %v974
    %vm1013 = vcmp.eq.s32.totalorder %v926, %v978
    %vm1014 = vcmp.eq.s32.totalorder %v926, %v982
    %vm1015 = vcmp.eq.s32.totalorder %v927, %v970
    %vm1016 = vcmp.eq.s32.totalorder %v927, %v974
    %vm1017 = vcmp.eq.s32.totalorder %v927, %v978
    %vm1018 = vcmp.eq.s32.totalorder %v927, %v982
    %vm1019 = vcmp.eq.s32.totalorder %v928, %v970
    %vm1020 = vcmp.eq.s32.totalorder %v928, %v974
    %vm1021 = vcmp.eq.s32.totalorder %v928, %v978
    %vm1022 = vcmp.eq.s32.totalorder %v928, %v982
    %vm1023 = vcmp.eq.s32.totalorder %v929, %v970
    %vm1024 = vcmp.eq.s32.totalorder %v929, %v974
    %vm1025 = vcmp.eq.s32.totalorder %v929, %v978
    %vm1026 = vcmp.eq.s32.totalorder %v929, %v982
    %vm1027 = vcmp.eq.s32.totalorder %v930, %v970
    %vm1028 = vcmp.eq.s32.totalorder %v930, %v974
    %vm1029 = vcmp.eq.s32.totalorder %v930, %v978
    %vm1030 = vcmp.eq.s32.totalorder %v930, %v982
    %vm1031 = vcmp.eq.s32.totalorder %v931, %v970
    %vm1032 = vcmp.eq.s32.totalorder %v931, %v974
    %vm1033 = vcmp.eq.s32.totalorder %v931, %v978
    %vm1034 = vcmp.eq.s32.totalorder %v931, %v982
    %vm1035 = vcmp.eq.s32.totalorder %v932, %v970
    %vm1036 = vcmp.eq.s32.totalorder %v932, %v974
    %vm1037 = vcmp.eq.s32.totalorder %v932, %v978
    %vm1038 = vcmp.eq.s32.totalorder %v932, %v982
    %vm1039 = vcmp.eq.s32.totalorder %v933, %v970
    %vm1040 = vcmp.eq.s32.totalorder %v933, %v974
    %vm1041 = vcmp.eq.s32.totalorder %v933, %v978
    %vm1042 = vcmp.eq.s32.totalorder %v933, %v982
    %vm1043 = vcmp.eq.s32.totalorder %v934, %v970
    %vm1044 = vcmp.eq.s32.totalorder %v934, %v974
    %vm1045 = vcmp.eq.s32.totalorder %v934, %v978
    %vm1046 = vcmp.eq.s32.totalorder %v934, %v982
    %v1047 = vsel %vm983, 1, 0
    %v1048 = vsel %vm984, 1, 0
    %v1049 = vsel %vm985, 1, 0
    %v1050 = vsel %vm986, 1, 0
    %v1051 = vsel %vm987, 1, 0
    %v1052 = vsel %vm988, 1, 0
    %v1053 = vsel %vm989, 1, 0
    %v1054 = vsel %vm990, 1, 0
    %v1055 = vsel %vm991, 1, 0
    %v1056 = vsel %vm992, 1, 0
    %v1057 = vsel %vm993, 1, 0
    %v1058 = vsel %vm994, 1, 0
    %v1059 = vsel %vm995, 1, 0
    %v1060 = vsel %vm996, 1, 0
    %v1061 = vsel %vm997, 1, 0
    %v1062 = vsel %vm998, 1, 0
    %v1063 = vsel %vm999, 1, 0
    %v1064 = vsel %vm1000, 1, 0
    %v1065 = vsel %vm1001, 1, 0
    %v1066 = vsel %vm1002, 1, 0
    %v1067 = vsel %vm1003, 1, 0
    %v1068 = vsel %vm1004, 1, 0
    %v1069 = vsel %vm1005, 1, 0
    %v1070 = vsel %vm1006, 1, 0
    %v1071 = vsel %vm1007, 1, 0
    %v1072 = vsel %vm1008, 1, 0
    %v1073 = vsel %vm1009, 1, 0
    %v1074 = vsel %vm1010, 1, 0
    %v1075 = vsel %vm1011, 1, 0
    %v1076 = vsel %vm1012, 1, 0
    %v1077 = vsel %vm1013, 1, 0
    %v1078 = vsel %vm1014, 1, 0
    %v1079 = vsel %vm1015, 1, 0
    %v1080 = vsel %vm1016, 1, 0
    %v1081 = vsel %vm1017, 1, 0
    %v1082 = vsel %vm1018, 1, 0
    %v1083 = vsel %vm1019, 1, 0
    %v1084 = vsel %vm1020, 1, 0
    %v1085 = vsel %vm1021, 1, 0
    %v1086 = vsel %vm1022, 1, 0
    %v1087 = vsel %vm1023, 1, 0
    %v1088 = vsel %vm1024, 1, 0
    %v1089 = vsel %vm1025, 1, 0
    %v1090 = vsel %vm1026, 1, 0
    %v1091 = vsel %vm1027, 1, 0
    %v1092 = vsel %vm1028, 1, 0
    %v1093 = vsel %vm1029, 1, 0
    %v1094 = vsel %vm1030, 1, 0
    %v1095 = vsel %vm1031, 1, 0
    %v1096 = vsel %vm1032, 1, 0
    %v1097 = vsel %vm1033, 1, 0
    %v1098 = vsel %vm1034, 1, 0
    %v1099 = vsel %vm1035, 1, 0
    %v1100 = vsel %vm1036, 1, 0
    %v1101 = vsel %vm1037, 1, 0
    %v1102 = vsel %vm1038, 1, 0
    %v1103 = vsel %vm1039, 1, 0
    %v1104 = vsel %vm1040, 1, 0
    %v1105 = vsel %vm1041, 1, 0
    %v1106 = vsel %vm1042, 1, 0
    %v1107 = vsel %vm1043, 1, 0
    %v1108 = vsel %vm1044, 1, 0
    %v1109 = vsel %vm1045, 1, 0
    %v1110 = vsel %vm1046, 1, 0
    %v1111 = vcvt.s32.f32 %v1047
    %v1112 = vcvt.s32.f32 %v1048
    %v1113 = vcvt.s32.f32 %v1049
    %v1114 = vcvt.s32.f32 %v1050
    %v1115 = vcvt.s32.f32 %v1051
    %v1116 = vcvt.s32.f32 %v1052
    %v1117 = vcvt.s32.f32 %v1053
    %v1118 = vcvt.s32.f32 %v1054
    %v1119 = vcvt.s32.f32 %v1055
    %v1120 = vcvt.s32.f32 %v1056
    %v1121 = vcvt.s32.f32 %v1057
    %v1122 = vcvt.s32.f32 %v1058
    %v1123 = vcvt.s32.f32 %v1059
    %v1124 = vcvt.s32.f32 %v1060
    %v1125 = vcvt.s32.f32 %v1061
    %v1126 = vcvt.s32.f32 %v1062
    %v1127 = vcvt.s32.f32 %v1063
    %v1128 = vcvt.s32.f32 %v1064
    %v1129 = vcvt.s32.f32 %v1065
    %v1130 = vcvt.s32.f32 %v1066
    %v1131 = vcvt.s32.f32 %v1067
    %v1132 = vcvt.s32.f32 %v1068
    %v1133 = vcvt.s32.f32 %v1069
    %v1134 = vcvt.s32.f32 %v1070
    %v1135 = vcvt.s32.f32 %v1071
    %v1136 = vcvt.s32.f32 %v1072
    %v1137 = vcvt.s32.f32 %v1073
    %v1138 = vcvt.s32.f32 %v1074
    %v1139 = vcvt.s32.f32 %v1075
    %v1140 = vcvt.s32.f32 %v1076
    %v1141 = vcvt.s32.f32 %v1077
    %v1142 = vcvt.s32.f32 %v1078
    %v1143 = vcvt.s32.f32 %v1079
    %v1144 = vcvt.s32.f32 %v1080
    %v1145 = vcvt.s32.f32 %v1081
    %v1146 = vcvt.s32.f32 %v1082
    %v1147 = vcvt.s32.f32 %v1083
    %v1148 = vcvt.s32.f32 %v1084
    %v1149 = vcvt.s32.f32 %v1085
    %v1150 = vcvt.s32.f32 %v1086
    %v1151 = vcvt.s32.f32 %v1087
    %v1152 = vcvt.s32.f32 %v1088
    %v1153 = vcvt.s32.f32 %v1089
    %v1154 = vcvt.s32.f32 %v1090
    %v1155 = vcvt.s32.f32 %v1091
    %v1156 = vcvt.s32.f32 %v1092
    %v1157 = vcvt.s32.f32 %v1093
    %v1158 = vcvt.s32.f32 %v1094
    %v1159 = vcvt.s32.f32 %v1095
    %v1160 = vcvt.s32.f32 %v1096
    %v1161 = vcvt.s32.f32 %v1097
    %v1162 = vcvt.s32.f32 %v1098
    %v1163 = vcvt.s32.f32 %v1099
    %v1164 = vcvt.s32.f32 %v1100
    %v1165 = vcvt.s32.f32 %v1101
    %v1166 = vcvt.s32.f32 %v1102
    %v1167 = vcvt.s32.f32 %v1103
    %v1168 = vcvt.s32.f32 %v1104
    %v1169 = vcvt.s32.f32 %v1105
    %v1170 = vcvt.s32.f32 %v1106
    %v1171 = vcvt.s32.f32 %v1107
    %v1172 = vcvt.s32.f32 %v1108
    %v1173 = vcvt.s32.f32 %v1109
    %v1174 = vcvt.s32.f32 %v1110
    %v1175 = vmul.f32 %v872, %v882
    %v1176 = vmul.f32 %v873, %v883
    %v1179 = vlaneseq
    %v1180 = vshrl.u32 %v1179, 7
    %v1181 = vsub.s32 0, %v1180
    %v1182 = vrot.slane %v1175, %v1181
    %v1183 = vlaneseq
    %v1184 = vshrl.u32 %v1183, 7
    %v1185 = vsub.s32 4, %v1184
    %v1186 = vrot.slane %v1175, %v1185
    %v1187 = vlaneseq
    %v1188 = vshrl.u32 %v1187, 7
    %v1189 = vsub.s32 0, %v1188
    %v1190 = vrot.slane %v1176, %v1189
    %v1191 = vlaneseq
    %v1192 = vshrl.u32 %v1191, 7
    %v1193 = vsub.s32 4, %v1192
    %v1194 = vrot.slane %v1176, %v1193
    %v1199 = vlaneseq
    %v1200 = vshrl.u32 %v1199, 7
    %v1201 = vsub.s32 0, %v1200
    %v1202 = vrot.slane %v1182, %v1201
    %v1203 = vlaneseq
    %v1204 = vshrl.u32 %v1203, 7
    %v1205 = vsub.s32 0, %v1204
    %v1206 = vrot.slane %v1186, %v1205
    %v1207 = vlaneseq
    %v1208 = vshrl.u32 %v1207, 7
    %v1209 = vsub.s32 0, %v1208
    %v1210 = vrot.slane %v1190, %v1209
    %v1211 = vlaneseq
    %v1212 = vshrl.u32 %v1211, 7
    %v1213 = vsub.s32 0, %v1212
    %v1214 = vrot.slane %v1194, %v1213
    %v1215 = vmul.f32 %v1111, %v1202
    %v1216 = vmul.f32 %v1112, %v1206
    %v1217 = vmul.f32 %v1113, %v1210
    %v1218 = vmul.f32 %v1114, %v1214
    %v1219 = vmul.f32 %v1115, %v1202
    %v1220 = vmul.f32 %v1116, %v1206
    %v1221 = vmul.f32 %v1117, %v1210
    %v1222 = vmul.f32 %v1118, %v1214
    %v1223 = vmul.f32 %v1119, %v1202
    %v1224 = vmul.f32 %v1120, %v1206
    %v1225 = vmul.f32 %v1121, %v1210
    %v1226 = vmul.f32 %v1122, %v1214
    %v1227 = vmul.f32 %v1123, %v1202
    %v1228 = vmul.f32 %v1124, %v1206
    %v1229 = vmul.f32 %v1125, %v1210
    %v1230 = vmul.f32 %v1126, %v1214
    %v1231 = vmul.f32 %v1127, %v1202
    %v1232 = vmul.f32 %v1128, %v1206
    %v1233 = vmul.f32 %v1129, %v1210
    %v1234 = vmul.f32 %v1130, %v1214
    %v1235 = vmul.f32 %v1131, %v1202
    %v1236 = vmul.f32 %v1132, %v1206
    %v1237 = vmul.f32 %v1133, %v1210
    %v1238 = vmul.f32 %v1134, %v1214
    %v1239 = vmul.f32 %v1135, %v1202
    %v1240 = vmul.f32 %v1136, %v1206
    %v1241 = vmul.f32 %v1137, %v1210
    %v1242 = vmul.f32 %v1138, %v1214
    %v1243 = vmul.f32 %v1139, %v1202
    %v1244 = vmul.f32 %v1140, %v1206
    %v1245 = vmul.f32 %v1141, %v1210
    %v1246 = vmul.f32 %v1142, %v1214
    %v1247 = vmul.f32 %v1143, %v1202
    %v1248 = vmul.f32 %v1144, %v1206
    %v1249 = vmul.f32 %v1145, %v1210
    %v1250 = vmul.f32 %v1146, %v1214
    %v1251 = vmul.f32 %v1147, %v1202
    %v1252 = vmul.f32 %v1148, %v1206
    %v1253 = vmul.f32 %v1149, %v1210
    %v1254 = vmul.f32 %v1150, %v1214
    %v1255 = vmul.f32 %v1151, %v1202
    %v1256 = vmul.f32 %v1152, %v1206
    %v1257 = vmul.f32 %v1153, %v1210
    %v1258 = vmul.f32 %v1154, %v1214
    %v1259 = vmul.f32 %v1155, %v1202
    %v1260 = vmul.f32 %v1156, %v1206
    %v1261 = vmul.f32 %v1157, %v1210
    %v1262 = vmul.f32 %v1158, %v1214
    %v1263 = vmul.f32 %v1159, %v1202
    %v1264 = vmul.f32 %v1160, %v1206
    %v1265 = vmul.f32 %v1161, %v1210
    %v1266 = vmul.f32 %v1162, %v1214
    %v1267 = vmul.f32 %v1163, %v1202
    %v1268 = vmul.f32 %v1164, %v1206
    %v1269 = vmul.f32 %v1165, %v1210
    %v1270 = vmul.f32 %v1166, %v1214
    %v1271 = vmul.f32 %v1167, %v1202
    %v1272 = vmul.f32 %v1168, %v1206
    %v1273 = vmul.f32 %v1169, %v1210
    %v1274 = vmul.f32 %v1170, %v1214
    %v1275 = vmul.f32 %v1171, %v1202
    %v1276 = vmul.f32 %v1172, %v1206
    %v1277 = vmul.f32 %v1173, %v1210
    %v1278 = vmul.f32 %v1174, %v1214
    %v1279 = vlaneseq
    %v1280 = vshrl.u32 %v1279, 7
    %v1281 = vsub.s32 0, %v1280
    %v1282 = vrot.slane %v868, %v1281
    %v1283 = vlaneseq
    %v1284 = vshrl.u32 %v1283, 7
    %v1285 = vsub.s32 4, %v1284
    %v1286 = vrot.slane %v868, %v1285
    %v1287 = vlaneseq
    %v1288 = vshrl.u32 %v1287, 7
    %v1289 = vsub.s32 0, %v1288
    %v1290 = vrot.slane %v869, %v1289
    %v1291 = vlaneseq
    %v1292 = vshrl.u32 %v1291, 7
    %v1293 = vsub.s32 4, %v1292
    %v1294 = vrot.slane %v869, %v1293
    %v1295 = vlaneseq
    %v1296 = vshrl.u32 %v1295, 7
    %v1297 = vsub.s32 0, %v1296
    %v1298 = vrot.slane %v1282, %v1297
    %v1299 = vlaneseq
    %v1300 = vshrl.u32 %v1299, 7
    %v1301 = vsub.s32 0, %v1300
    %v1302 = vrot.slane %v1286, %v1301
    %v1303 = vlaneseq
    %v1304 = vshrl.u32 %v1303, 7
    %v1305 = vsub.s32 0, %v1304
    %v1306 = vrot.slane %v1290, %v1305
    %v1307 = vlaneseq
    %v1308 = vshrl.u32 %v1307, 7
    %v1309 = vsub.s32 0, %v1308
    %v1310 = vrot.slane %v1294, %v1309
    %vm1311 = vcmp.eq.s32.totalorder %v919, %v1298
    %vm1312 = vcmp.eq.s32.totalorder %v919, %v1302
    %vm1313 = vcmp.eq.s32.totalorder %v919, %v1306
    %vm1314 = vcmp.eq.s32.totalorder %v919, %v1310
    %vm1315 = vcmp.eq.s32.totalorder %v920, %v1298
    %vm1316 = vcmp.eq.s32.totalorder %v920, %v1302
    %vm1317 = vcmp.eq.s32.totalorder %v920, %v1306
    %vm1318 = vcmp.eq.s32.totalorder %v920, %v1310
    %vm1319 = vcmp.eq.s32.totalorder %v921, %v1298
    %vm1320 = vcmp.eq.s32.totalorder %v921, %v1302
    %vm1321 = vcmp.eq.s32.totalorder %v921, %v1306
    %vm1322 = vcmp.eq.s32.totalorder %v921, %v1310
    %vm1323 = vcmp.eq.s32.totalorder %v922, %v1298
    %vm1324 = vcmp.eq.s32.totalorder %v922, %v1302
    %vm1325 = vcmp.eq.s32.totalorder %v922, %v1306
    %vm1326 = vcmp.eq.s32.totalorder %v922, %v1310
    %vm1327 = vcmp.eq.s32.totalorder %v923, %v1298
    %vm1328 = vcmp.eq.s32.totalorder %v923, %v1302
    %vm1329 = vcmp.eq.s32.totalorder %v923, %v1306
    %vm1330 = vcmp.eq.s32.totalorder %v923, %v1310
    %vm1331 = vcmp.eq.s32.totalorder %v924, %v1298
    %vm1332 = vcmp.eq.s32.totalorder %v924, %v1302
    %vm1333 = vcmp.eq.s32.totalorder %v924, %v1306
    %vm1334 = vcmp.eq.s32.totalorder %v924, %v1310
    %vm1335 = vcmp.eq.s32.totalorder %v925, %v1298
    %vm1336 = vcmp.eq.s32.totalorder %v925, %v1302
    %vm1337 = vcmp.eq.s32.totalorder %v925, %v1306
    %vm1338 = vcmp.eq.s32.totalorder %v925, %v1310
    %vm1339 = vcmp.eq.s32.totalorder %v926, %v1298
    %vm1340 = vcmp.eq.s32.totalorder %v926, %v1302
    %vm1341 = vcmp.eq.s32.totalorder %v926, %v1306
    %vm1342 = vcmp.eq.s32.totalorder %v926, %v1310
    %vm1343 = vcmp.eq.s32.totalorder %v927, %v1298
    %vm1344 = vcmp.eq.s32.totalorder %v927, %v1302
    %vm1345 = vcmp.eq.s32.totalorder %v927, %v1306
    %vm1346 = vcmp.eq.s32.totalorder %v927, %v1310
    %vm1347 = vcmp.eq.s32.totalorder %v928, %v1298
    %vm1348 = vcmp.eq.s32.totalorder %v928, %v1302
    %vm1349 = vcmp.eq.s32.totalorder %v928, %v1306
    %vm1350 = vcmp.eq.s32.totalorder %v928, %v1310
    %vm1351 = vcmp.eq.s32.totalorder %v929, %v1298
    %vm1352 = vcmp.eq.s32.totalorder %v929, %v1302
    %vm1353 = vcmp.eq.s32.totalorder %v929, %v1306
    %vm1354 = vcmp.eq.s32.totalorder %v929, %v1310
    %vm1355 = vcmp.eq.s32.totalorder %v930, %v1298
    %vm1356 = vcmp.eq.s32.totalorder %v930, %v1302
    %vm1357 = vcmp.eq.s32.totalorder %v930, %v1306
    %vm1358 = vcmp.eq.s32.totalorder %v930, %v1310
    %vm1359 = vcmp.eq.s32.totalorder %v931, %v1298
    %vm1360 = vcmp.eq.s32.totalorder %v931, %v1302
    %vm1361 = vcmp.eq.s32.totalorder %v931, %v1306
    %vm1362 = vcmp.eq.s32.totalorder %v931, %v1310
    %vm1363 = vcmp.eq.s32.totalorder %v932, %v1298
    %vm1364 = vcmp.eq.s32.totalorder %v932, %v1302
    %vm1365 = vcmp.eq.s32.totalorder %v932, %v1306
    %vm1366 = vcmp.eq.s32.totalorder %v932, %v1310
    %vm1367 = vcmp.eq.s32.totalorder %v933, %v1298
    %vm1368 = vcmp.eq.s32.totalorder %v933, %v1302
    %vm1369 = vcmp.eq.s32.totalorder %v933, %v1306
    %vm1370 = vcmp.eq.s32.totalorder %v933, %v1310
    %vm1371 = vcmp.eq.s32.totalorder %v934, %v1298
    %vm1372 = vcmp.eq.s32.totalorder %v934, %v1302
    %vm1373 = vcmp.eq.s32.totalorder %v934, %v1306
    %vm1374 = vcmp.eq.s32.totalorder %v934, %v1310
    %v1375 = vsel %vm1311, 1, 0
    %v1376 = vsel %vm1312, 1, 0
    %v1377 = vsel %vm1313, 1, 0
    %v1378 = vsel %vm1314, 1, 0
    %v1379 = vsel %vm1315, 1, 0
    %v1380 = vsel %vm1316, 1, 0
    %v1381 = vsel %vm1317, 1, 0
    %v1382 = vsel %vm1318, 1, 0
    %v1383 = vsel %vm1319, 1, 0
    %v1384 = vsel %vm1320, 1, 0
    %v1385 = vsel %vm1321, 1, 0
    %v1386 = vsel %vm1322, 1, 0
    %v1387 = vsel %vm1323, 1, 0
    %v1388 = vsel %vm1324, 1, 0
    %v1389 = vsel %vm1325, 1, 0
    %v1390 = vsel %vm1326, 1, 0
    %v1391 = vsel %vm1327, 1, 0
    %v1392 = vsel %vm1328, 1, 0
    %v1393 = vsel %vm1329, 1, 0
    %v1394 = vsel %vm1330, 1, 0
    %v1395 = vsel %vm1331, 1, 0
    %v1396 = vsel %vm1332, 1, 0
    %v1397 = vsel %vm1333, 1, 0
    %v1398 = vsel %vm1334, 1, 0
    %v1399 = vsel %vm1335, 1, 0
    %v1400 = vsel %vm1336, 1, 0
    %v1401 = vsel %vm1337, 1, 0
    %v1402 = vsel %vm1338, 1, 0
    %v1403 = vsel %vm1339, 1, 0
    %v1404 = vsel %vm1340, 1, 0
    %v1405 = vsel %vm1341, 1, 0
    %v1406 = vsel %vm1342, 1, 0
    %v1407 = vsel %vm1343, 1, 0
    %v1408 = vsel %vm1344, 1, 0
    %v1409 = vsel %vm1345, 1, 0
    %v1410 = vsel %vm1346, 1, 0
    %v1411 = vsel %vm1347, 1, 0
    %v1412 = vsel %vm1348, 1, 0
    %v1413 = vsel %vm1349, 1, 0
    %v1414 = vsel %vm1350, 1, 0
    %v1415 = vsel %vm1351, 1, 0
    %v1416 = vsel %vm1352, 1, 0
    %v1417 = vsel %vm1353, 1, 0
    %v1418 = vsel %vm1354, 1, 0
    %v1419 = vsel %vm1355, 1, 0
    %v1420 = vsel %vm1356, 1, 0
    %v1421 = vsel %vm1357, 1, 0
    %v1422 = vsel %vm1358, 1, 0
    %v1423 = vsel %vm1359, 1, 0
    %v1424 = vsel %vm1360, 1, 0
    %v1425 = vsel %vm1361, 1, 0
    %v1426 = vsel %vm1362, 1, 0
    %v1427 = vsel %vm1363, 1, 0
    %v1428 = vsel %vm1364, 1, 0
    %v1429 = vsel %vm1365, 1, 0
    %v1430 = vsel %vm1366, 1, 0
    %v1431 = vsel %vm1367, 1, 0
    %v1432 = vsel %vm1368, 1, 0
    %v1433 = vsel %vm1369, 1, 0
    %v1434 = vsel %vm1370, 1, 0
    %v1435 = vsel %vm1371, 1, 0
    %v1436 = vsel %vm1372, 1, 0
    %v1437 = vsel %vm1373, 1, 0
    %v1438 = vsel %vm1374, 1, 0
    %v1439 = vcvt.s32.f32 %v1375
    %v1440 = vcvt.s32.f32 %v1376
    %v1441 = vcvt.s32.f32 %v1377
    %v1442 = vcvt.s32.f32 %v1378
    %v1443 = vcvt.s32.f32 %v1379
    %v1444 = vcvt.s32.f32 %v1380
    %v1445 = vcvt.s32.f32 %v1381
    %v1446 = vcvt.s32.f32 %v1382
    %v1447 = vcvt.s32.f32 %v1383
    %v1448 = vcvt.s32.f32 %v1384
    %v1449 = vcvt.s32.f32 %v1385
    %v1450 = vcvt.s32.f32 %v1386
    %v1451 = vcvt.s32.f32 %v1387
    %v1452 = vcvt.s32.f32 %v1388
    %v1453 = vcvt.s32.f32 %v1389
    %v1454 = vcvt.s32.f32 %v1390
    %v1455 = vcvt.s32.f32 %v1391
    %v1456 = vcvt.s32.f32 %v1392
    %v1457 = vcvt.s32.f32 %v1393
    %v1458 = vcvt.s32.f32 %v1394
    %v1459 = vcvt.s32.f32 %v1395
    %v1460 = vcvt.s32.f32 %v1396
    %v1461 = vcvt.s32.f32 %v1397
    %v1462 = vcvt.s32.f32 %v1398
    %v1463 = vcvt.s32.f32 %v1399
    %v1464 = vcvt.s32.f32 %v1400
    %v1465 = vcvt.s32.f32 %v1401
    %v1466 = vcvt.s32.f32 %v1402
    %v1467 = vcvt.s32.f32 %v1403
    %v1468 = vcvt.s32.f32 %v1404
    %v1469 = vcvt.s32.f32 %v1405
    %v1470 = vcvt.s32.f32 %v1406
    %v1471 = vcvt.s32.f32 %v1407
    %v1472 = vcvt.s32.f32 %v1408
    %v1473 = vcvt.s32.f32 %v1409
    %v1474 = vcvt.s32.f32 %v1410
    %v1475 = vcvt.s32.f32 %v1411
    %v1476 = vcvt.s32.f32 %v1412
    %v1477 = vcvt.s32.f32 %v1413
    %v1478 = vcvt.s32.f32 %v1414
    %v1479 = vcvt.s32.f32 %v1415
    %v1480 = vcvt.s32.f32 %v1416
    %v1481 = vcvt.s32.f32 %v1417
    %v1482 = vcvt.s32.f32 %v1418
    %v1483 = vcvt.s32.f32 %v1419
    %v1484 = vcvt.s32.f32 %v1420
    %v1485 = vcvt.s32.f32 %v1421
    %v1486 = vcvt.s32.f32 %v1422
    %v1487 = vcvt.s32.f32 %v1423
    %v1488 = vcvt.s32.f32 %v1424
    %v1489 = vcvt.s32.f32 %v1425
    %v1490 = vcvt.s32.f32 %v1426
    %v1491 = vcvt.s32.f32 %v1427
    %v1492 = vcvt.s32.f32 %v1428
    %v1493 = vcvt.s32.f32 %v1429
    %v1494 = vcvt.s32.f32 %v1430
    %v1495 = vcvt.s32.f32 %v1431
    %v1496 = vcvt.s32.f32 %v1432
    %v1497 = vcvt.s32.f32 %v1433
    %v1498 = vcvt.s32.f32 %v1434
    %v1499 = vcvt.s32.f32 %v1435
    %v1500 = vcvt.s32.f32 %v1436
    %v1501 = vcvt.s32.f32 %v1437
    %v1502 = vcvt.s32.f32 %v1438
    %v1503 = vmul.f32 %v870, %v892
    %v1504 = vmul.f32 %v871, %v893
    %v1507 = vlaneseq
    %v1508 = vshrl.u32 %v1507, 7
    %v1509 = vsub.s32 0, %v1508
    %v1510 = vrot.slane %v1503, %v1509
    %v1511 = vlaneseq
    %v1512 = vshrl.u32 %v1511, 7
    %v1513 = vsub.s32 4, %v1512
    %v1514 = vrot.slane %v1503, %v1513
    %v1515 = vlaneseq
    %v1516 = vshrl.u32 %v1515, 7
    %v1517 = vsub.s32 0, %v1516
    %v1518 = vrot.slane %v1504, %v1517
    %v1519 = vlaneseq
    %v1520 = vshrl.u32 %v1519, 7
    %v1521 = vsub.s32 4, %v1520
    %v1522 = vrot.slane %v1504, %v1521
    %v1527 = vlaneseq
    %v1528 = vshrl.u32 %v1527, 7
    %v1529 = vsub.s32 0, %v1528
    %v1530 = vrot.slane %v1510, %v1529
    %v1531 = vlaneseq
    %v1532 = vshrl.u32 %v1531, 7
    %v1533 = vsub.s32 0, %v1532
    %v1534 = vrot.slane %v1514, %v1533
    %v1535 = vlaneseq
    %v1536 = vshrl.u32 %v1535, 7
    %v1537 = vsub.s32 0, %v1536
    %v1538 = vrot.slane %v1518, %v1537
    %v1539 = vlaneseq
    %v1540 = vshrl.u32 %v1539, 7
    %v1541 = vsub.s32 0, %v1540
    %v1542 = vrot.slane %v1522, %v1541
    %v1543 = vmul.f32 %v1439, %v1530
    %v1544 = vmul.f32 %v1440, %v1534
    %v1545 = vmul.f32 %v1441, %v1538
    %v1546 = vmul.f32 %v1442, %v1542
    %v1547 = vmul.f32 %v1443, %v1530
    %v1548 = vmul.f32 %v1444, %v1534
    %v1549 = vmul.f32 %v1445, %v1538
    %v1550 = vmul.f32 %v1446, %v1542
    %v1551 = vmul.f32 %v1447, %v1530
    %v1552 = vmul.f32 %v1448, %v1534
    %v1553 = vmul.f32 %v1449, %v1538
    %v1554 = vmul.f32 %v1450, %v1542
    %v1555 = vmul.f32 %v1451, %v1530
    %v1556 = vmul.f32 %v1452, %v1534
    %v1557 = vmul.f32 %v1453, %v1538
    %v1558 = vmul.f32 %v1454, %v1542
    %v1559 = vmul.f32 %v1455, %v1530
    %v1560 = vmul.f32 %v1456, %v1534
    %v1561 = vmul.f32 %v1457, %v1538
    %v1562 = vmul.f32 %v1458, %v1542
    %v1563 = vmul.f32 %v1459, %v1530
    %v1564 = vmul.f32 %v1460, %v1534
    %v1565 = vmul.f32 %v1461, %v1538
    %v1566 = vmul.f32 %v1462, %v1542
    %v1567 = vmul.f32 %v1463, %v1530
    %v1568 = vmul.f32 %v1464, %v1534
    %v1569 = vmul.f32 %v1465, %v1538
    %v1570 = vmul.f32 %v1466, %v1542
    %v1571 = vmul.f32 %v1467, %v1530
    %v1572 = vmul.f32 %v1468, %v1534
    %v1573 = vmul.f32 %v1469, %v1538
    %v1574 = vmul.f32 %v1470, %v1542
    %v1575 = vmul.f32 %v1471, %v1530
    %v1576 = vmul.f32 %v1472, %v1534
    %v1577 = vmul.f32 %v1473, %v1538
    %v1578 = vmul.f32 %v1474, %v1542
    %v1579 = vmul.f32 %v1475, %v1530
    %v1580 = vmul.f32 %v1476, %v1534
    %v1581 = vmul.f32 %v1477, %v1538
    %v1582 = vmul.f32 %v1478, %v1542
    %v1583 = vmul.f32 %v1479, %v1530
    %v1584 = vmul.f32 %v1480, %v1534
    %v1585 = vmul.f32 %v1481, %v1538
    %v1586 = vmul.f32 %v1482, %v1542
    %v1587 = vmul.f32 %v1483, %v1530
    %v1588 = vmul.f32 %v1484, %v1534
    %v1589 = vmul.f32 %v1485, %v1538
    %v1590 = vmul.f32 %v1486, %v1542
    %v1591 = vmul.f32 %v1487, %v1530
    %v1592 = vmul.f32 %v1488, %v1534
    %v1593 = vmul.f32 %v1489, %v1538
    %v1594 = vmul.f32 %v1490, %v1542
    %v1595 = vmul.f32 %v1491, %v1530
    %v1596 = vmul.f32 %v1492, %v1534
    %v1597 = vmul.f32 %v1493, %v1538
    %v1598 = vmul.f32 %v1494, %v1542
    %v1599 = vmul.f32 %v1495, %v1530
    %v1600 = vmul.f32 %v1496, %v1534
    %v1601 = vmul.f32 %v1497, %v1538
    %v1602 = vmul.f32 %v1498, %v1542
    %v1603 = vmul.f32 %v1499, %v1530
    %v1604 = vmul.f32 %v1500, %v1534
    %v1605 = vmul.f32 %v1501, %v1538
    %v1606 = vmul.f32 %v1502, %v1542
    %v1607 = vadd.f32 %v1215, %v1543
    %v1608 = vadd.f32 %v1216, %v1544
    %v1609 = vadd.f32 %v1217, %v1545
    %v1610 = vadd.f32 %v1218, %v1546
    %v1611 = vadd.f32 %v1219, %v1547
    %v1612 = vadd.f32 %v1220, %v1548
    %v1613 = vadd.f32 %v1221, %v1549
    %v1614 = vadd.f32 %v1222, %v1550
    %v1615 = vadd.f32 %v1223, %v1551
    %v1616 = vadd.f32 %v1224, %v1552
    %v1617 = vadd.f32 %v1225, %v1553
    %v1618 = vadd.f32 %v1226, %v1554
    %v1619 = vadd.f32 %v1227, %v1555
    %v1620 = vadd.f32 %v1228, %v1556
    %v1621 = vadd.f32 %v1229, %v1557
    %v1622 = vadd.f32 %v1230, %v1558
    %v1623 = vadd.f32 %v1231, %v1559
    %v1624 = vadd.f32 %v1232, %v1560
    %v1625 = vadd.f32 %v1233, %v1561
    %v1626 = vadd.f32 %v1234, %v1562
    %v1627 = vadd.f32 %v1235, %v1563
    %v1628 = vadd.f32 %v1236, %v1564
    %v1629 = vadd.f32 %v1237, %v1565
    %v1630 = vadd.f32 %v1238, %v1566
    %v1631 = vadd.f32 %v1239, %v1567
    %v1632 = vadd.f32 %v1240, %v1568
    %v1633 = vadd.f32 %v1241, %v1569
    %v1634 = vadd.f32 %v1242, %v1570
    %v1635 = vadd.f32 %v1243, %v1571
    %v1636 = vadd.f32 %v1244, %v1572
    %v1637 = vadd.f32 %v1245, %v1573
    %v1638 = vadd.f32 %v1246, %v1574
    %v1639 = vadd.f32 %v1247, %v1575
    %v1640 = vadd.f32 %v1248, %v1576
    %v1641 = vadd.f32 %v1249, %v1577
    %v1642 = vadd.f32 %v1250, %v1578
    %v1643 = vadd.f32 %v1251, %v1579
    %v1644 = vadd.f32 %v1252, %v1580
    %v1645 = vadd.f32 %v1253, %v1581
    %v1646 = vadd.f32 %v1254, %v1582
    %v1647 = vadd.f32 %v1255, %v1583
    %v1648 = vadd.f32 %v1256, %v1584
    %v1649 = vadd.f32 %v1257, %v1585
    %v1650 = vadd.f32 %v1258, %v1586
    %v1651 = vadd.f32 %v1259, %v1587
    %v1652 = vadd.f32 %v1260, %v1588
    %v1653 = vadd.f32 %v1261, %v1589
    %v1654 = vadd.f32 %v1262, %v1590
    %v1655 = vadd.f32 %v1263, %v1591
    %v1656 = vadd.f32 %v1264, %v1592
    %v1657 = vadd.f32 %v1265, %v1593
    %v1658 = vadd.f32 %v1266, %v1594
    %v1659 = vadd.f32 %v1267, %v1595
    %v1660 = vadd.f32 %v1268, %v1596
    %v1661 = vadd.f32 %v1269, %v1597
    %v1662 = vadd.f32 %v1270, %v1598
    %v1663 = vadd.f32 %v1271, %v1599
    %v1664 = vadd.f32 %v1272, %v1600
    %v1665 = vadd.f32 %v1273, %v1601
    %v1666 = vadd.f32 %v1274, %v1602
    %v1667 = vadd.f32 %v1275, %v1603
    %v1668 = vadd.f32 %v1276, %v1604
    %v1669 = vadd.f32 %v1277, %v1605
    %v1670 = vadd.f32 %v1278, %v1606
    %v1671 = vlaneseq
    %v1672 = vshrl.u32 %v1671, 7
    %v1673 = vsub.s32 1, %v1672
    %v1674 = vrot.slane %v898, %v1673
    %v1675 = vlaneseq
    %v1676 = vshrl.u32 %v1675, 7
    %v1677 = vsub.s32 5, %v1676
    %v1678 = vrot.slane %v898, %v1677
    %v1679 = vlaneseq
    %v1680 = vshrl.u32 %v1679, 7
    %v1681 = vsub.s32 1, %v1680
    %v1682 = vrot.slane %v899, %v1681
    %v1683 = vlaneseq
    %v1684 = vshrl.u32 %v1683, 7
    %v1685 = vsub.s32 5, %v1684
    %v1686 = vrot.slane %v899, %v1685
    %v1687 = vlaneseq
    %v1688 = vshrl.u32 %v1687, 7
    %v1689 = vsub.s32 1, %v1688
    %v1690 = vrot.slane %v1674, %v1689
    %v1691 = vlaneseq
    %v1692 = vshrl.u32 %v1691, 7
    %v1693 = vsub.s32 1, %v1692
    %v1694 = vrot.slane %v1678, %v1693
    %v1695 = vlaneseq
    %v1696 = vshrl.u32 %v1695, 7
    %v1697 = vsub.s32 1, %v1696
    %v1698 = vrot.slane %v1682, %v1697
    %v1699 = vlaneseq
    %v1700 = vshrl.u32 %v1699, 7
    %v1701 = vsub.s32 1, %v1700
    %v1702 = vrot.slane %v1686, %v1701
    %vm1703 = vcmp.eq.s32.totalorder %v935, %v1690
    %vm1704 = vcmp.eq.s32.totalorder %v935, %v1694
    %vm1705 = vcmp.eq.s32.totalorder %v935, %v1698
    %vm1706 = vcmp.eq.s32.totalorder %v935, %v1702
    %vm1707 = vcmp.eq.s32.totalorder %v936, %v1690
    %vm1708 = vcmp.eq.s32.totalorder %v936, %v1694
    %vm1709 = vcmp.eq.s32.totalorder %v936, %v1698
    %vm1710 = vcmp.eq.s32.totalorder %v936, %v1702
    %vm1711 = vcmp.eq.s32.totalorder %v937, %v1690
    %vm1712 = vcmp.eq.s32.totalorder %v937, %v1694
    %vm1713 = vcmp.eq.s32.totalorder %v937, %v1698
    %vm1714 = vcmp.eq.s32.totalorder %v937, %v1702
    %vm1715 = vcmp.eq.s32.totalorder %v938, %v1690
    %vm1716 = vcmp.eq.s32.totalorder %v938, %v1694
    %vm1717 = vcmp.eq.s32.totalorder %v938, %v1698
    %vm1718 = vcmp.eq.s32.totalorder %v938, %v1702
    %vm1719 = vcmp.eq.s32.totalorder %v939, %v1690
    %vm1720 = vcmp.eq.s32.totalorder %v939, %v1694
    %vm1721 = vcmp.eq.s32.totalorder %v939, %v1698
    %vm1722 = vcmp.eq.s32.totalorder %v939, %v1702
    %vm1723 = vcmp.eq.s32.totalorder %v940, %v1690
    %vm1724 = vcmp.eq.s32.totalorder %v940, %v1694
    %vm1725 = vcmp.eq.s32.totalorder %v940, %v1698
    %vm1726 = vcmp.eq.s32.totalorder %v940, %v1702
    %vm1727 = vcmp.eq.s32.totalorder %v941, %v1690
    %vm1728 = vcmp.eq.s32.totalorder %v941, %v1694
    %vm1729 = vcmp.eq.s32.totalorder %v941, %v1698
    %vm1730 = vcmp.eq.s32.totalorder %v941, %v1702
    %vm1731 = vcmp.eq.s32.totalorder %v942, %v1690
    %vm1732 = vcmp.eq.s32.totalorder %v942, %v1694
    %vm1733 = vcmp.eq.s32.totalorder %v942, %v1698
    %vm1734 = vcmp.eq.s32.totalorder %v942, %v1702
    %vm1735 = vcmp.eq.s32.totalorder %v943, %v1690
    %vm1736 = vcmp.eq.s32.totalorder %v943, %v1694
    %vm1737 = vcmp.eq.s32.totalorder %v943, %v1698
    %vm1738 = vcmp.eq.s32.totalorder %v943, %v1702
    %vm1739 = vcmp.eq.s32.totalorder %v944, %v1690
    %vm1740 = vcmp.eq.s32.totalorder %v944, %v1694
    %vm1741 = vcmp.eq.s32.totalorder %v944, %v1698
    %vm1742 = vcmp.eq.s32.totalorder %v944, %v1702
    %vm1743 = vcmp.eq.s32.totalorder %v945, %v1690
    %vm1744 = vcmp.eq.s32.totalorder %v945, %v1694
    %vm1745 = vcmp.eq.s32.totalorder %v945, %v1698
    %vm1746 = vcmp.eq.s32.totalorder %v945, %v1702
    %vm1747 = vcmp.eq.s32.totalorder %v946, %v1690
    %vm1748 = vcmp.eq.s32.totalorder %v946, %v1694
    %vm1749 = vcmp.eq.s32.totalorder %v946, %v1698
    %vm1750 = vcmp.eq.s32.totalorder %v946, %v1702
    %vm1751 = vcmp.eq.s32.totalorder %v947, %v1690
    %vm1752 = vcmp.eq.s32.totalorder %v947, %v1694
    %vm1753 = vcmp.eq.s32.totalorder %v947, %v1698
    %vm1754 = vcmp.eq.s32.totalorder %v947, %v1702
    %vm1755 = vcmp.eq.s32.totalorder %v948, %v1690
    %vm1756 = vcmp.eq.s32.totalorder %v948, %v1694
    %vm1757 = vcmp.eq.s32.totalorder %v948, %v1698
    %vm1758 = vcmp.eq.s32.totalorder %v948, %v1702
    %vm1759 = vcmp.eq.s32.totalorder %v949, %v1690
    %vm1760 = vcmp.eq.s32.totalorder %v949, %v1694
    %vm1761 = vcmp.eq.s32.totalorder %v949, %v1698
    %vm1762 = vcmp.eq.s32.totalorder %v949, %v1702
    %vm1763 = vcmp.eq.s32.totalorder %v950, %v1690
    %vm1764 = vcmp.eq.s32.totalorder %v950, %v1694
    %vm1765 = vcmp.eq.s32.totalorder %v950, %v1698
    %vm1766 = vcmp.eq.s32.totalorder %v950, %v1702
    %v1767 = vsel %vm1703, 1, 0
    %v1768 = vsel %vm1704, 1, 0
    %v1769 = vsel %vm1705, 1, 0
    %v1770 = vsel %vm1706, 1, 0
    %v1771 = vsel %vm1707, 1, 0
    %v1772 = vsel %vm1708, 1, 0
    %v1773 = vsel %vm1709, 1, 0
    %v1774 = vsel %vm1710, 1, 0
    %v1775 = vsel %vm1711, 1, 0
    %v1776 = vsel %vm1712, 1, 0
    %v1777 = vsel %vm1713, 1, 0
    %v1778 = vsel %vm1714, 1, 0
    %v1779 = vsel %vm1715, 1, 0
    %v1780 = vsel %vm1716, 1, 0
    %v1781 = vsel %vm1717, 1, 0
    %v1782 = vsel %vm1718, 1, 0
    %v1783 = vsel %vm1719, 1, 0
    %v1784 = vsel %vm1720, 1, 0
    %v1785 = vsel %vm1721, 1, 0
    %v1786 = vsel %vm1722, 1, 0
    %v1787 = vsel %vm1723, 1, 0
    %v1788 = vsel %vm1724, 1, 0
    %v1789 = vsel %vm1725, 1, 0
    %v1790 = vsel %vm1726, 1, 0
    %v1791 = vsel %vm1727, 1, 0
    %v1792 = vsel %vm1728, 1, 0
    %v1793 = vsel %vm1729, 1, 0
    %v1794 = vsel %vm1730, 1, 0
    %v1795 = vsel %vm1731, 1, 0
    %v1796 = vsel %vm1732, 1, 0
    %v1797 = vsel %vm1733, 1, 0
    %v1798 = vsel %vm1734, 1, 0
    %v1799 = vsel %vm1735, 1, 0
    %v1800 = vsel %vm1736, 1, 0
    %v1801 = vsel %vm1737, 1, 0
    %v1802 = vsel %vm1738, 1, 0
    %v1803 = vsel %vm1739, 1, 0
    %v1804 = vsel %vm1740, 1, 0
    %v1805 = vsel %vm1741, 1, 0
    %v1806 = vsel %vm1742, 1, 0
    %v1807 = vsel %vm1743, 1, 0
    %v1808 = vsel %vm1744, 1, 0
    %v1809 = vsel %vm1745, 1, 0
    %v1810 = vsel %vm1746, 1, 0
    %v1811 = vsel %vm1747, 1, 0
    %v1812 = vsel %vm1748, 1, 0
    %v1813 = vsel %vm1749, 1, 0
    %v1814 = vsel %vm1750, 1, 0
    %v1815 = vsel %vm1751, 1, 0
    %v1816 = vsel %vm1752, 1, 0
    %v1817 = vsel %vm1753, 1, 0
    %v1818 = vsel %vm1754, 1, 0
    %v1819 = vsel %vm1755, 1, 0
    %v1820 = vsel %vm1756, 1, 0
    %v1821 = vsel %vm1757, 1, 0
    %v1822 = vsel %vm1758, 1, 0
    %v1823 = vsel %vm1759, 1, 0
    %v1824 = vsel %vm1760, 1, 0
    %v1825 = vsel %vm1761, 1, 0
    %v1826 = vsel %vm1762, 1, 0
    %v1827 = vsel %vm1763, 1, 0
    %v1828 = vsel %vm1764, 1, 0
    %v1829 = vsel %vm1765, 1, 0
    %v1830 = vsel %vm1766, 1, 0
    %v1831 = vcvt.s32.f32 %v1767
    %v1832 = vcvt.s32.f32 %v1768
    %v1833 = vcvt.s32.f32 %v1769
    %v1834 = vcvt.s32.f32 %v1770
    %v1835 = vcvt.s32.f32 %v1771
    %v1836 = vcvt.s32.f32 %v1772
    %v1837 = vcvt.s32.f32 %v1773
    %v1838 = vcvt.s32.f32 %v1774
    %v1839 = vcvt.s32.f32 %v1775
    %v1840 = vcvt.s32.f32 %v1776
    %v1841 = vcvt.s32.f32 %v1777
    %v1842 = vcvt.s32.f32 %v1778
    %v1843 = vcvt.s32.f32 %v1779
    %v1844 = vcvt.s32.f32 %v1780
    %v1845 = vcvt.s32.f32 %v1781
    %v1846 = vcvt.s32.f32 %v1782
    %v1847 = vcvt.s32.f32 %v1783
    %v1848 = vcvt.s32.f32 %v1784
    %v1849 = vcvt.s32.f32 %v1785
    %v1850 = vcvt.s32.f32 %v1786
    %v1851 = vcvt.s32.f32 %v1787
    %v1852 = vcvt.s32.f32 %v1788
    %v1853 = vcvt.s32.f32 %v1789
    %v1854 = vcvt.s32.f32 %v1790
    %v1855 = vcvt.s32.f32 %v1791
    %v1856 = vcvt.s32.f32 %v1792
    %v1857 = vcvt.s32.f32 %v1793
    %v1858 = vcvt.s32.f32 %v1794
    %v1859 = vcvt.s32.f32 %v1795
    %v1860 = vcvt.s32.f32 %v1796
    %v1861 = vcvt.s32.f32 %v1797
    %v1862 = vcvt.s32.f32 %v1798
    %v1863 = vcvt.s32.f32 %v1799
    %v1864 = vcvt.s32.f32 %v1800
    %v1865 = vcvt.s32.f32 %v1801
    %v1866 = vcvt.s32.f32 %v1802
    %v1867 = vcvt.s32.f32 %v1803
    %v1868 = vcvt.s32.f32 %v1804
    %v1869 = vcvt.s32.f32 %v1805
    %v1870 = vcvt.s32.f32 %v1806
    %v1871 = vcvt.s32.f32 %v1807
    %v1872 = vcvt.s32.f32 %v1808
    %v1873 = vcvt.s32.f32 %v1809
    %v1874 = vcvt.s32.f32 %v1810
    %v1875 = vcvt.s32.f32 %v1811
    %v1876 = vcvt.s32.f32 %v1812
    %v1877 = vcvt.s32.f32 %v1813
    %v1878 = vcvt.s32.f32 %v1814
    %v1879 = vcvt.s32.f32 %v1815
    %v1880 = vcvt.s32.f32 %v1816
    %v1881 = vcvt.s32.f32 %v1817
    %v1882 = vcvt.s32.f32 %v1818
    %v1883 = vcvt.s32.f32 %v1819
    %v1884 = vcvt.s32.f32 %v1820
    %v1885 = vcvt.s32.f32 %v1821
    %v1886 = vcvt.s32.f32 %v1822
    %v1887 = vcvt.s32.f32 %v1823
    %v1888 = vcvt.s32.f32 %v1824
    %v1889 = vcvt.s32.f32 %v1825
    %v1890 = vcvt.s32.f32 %v1826
    %v1891 = vcvt.s32.f32 %v1827
    %v1892 = vcvt.s32.f32 %v1828
    %v1893 = vcvt.s32.f32 %v1829
    %v1894 = vcvt.s32.f32 %v1830
    %v1895 = vlaneseq
    %v1896 = vshrl.u32 %v1895, 7
    %v1897 = vsub.s32 1, %v1896
    %v1898 = vrot.slane %v1175, %v1897
    %v1899 = vlaneseq
    %v1900 = vshrl.u32 %v1899, 7
    %v1901 = vsub.s32 5, %v1900
    %v1902 = vrot.slane %v1175, %v1901
    %v1903 = vlaneseq
    %v1904 = vshrl.u32 %v1903, 7
    %v1905 = vsub.s32 1, %v1904
    %v1906 = vrot.slane %v1176, %v1905
    %v1907 = vlaneseq
    %v1908 = vshrl.u32 %v1907, 7
    %v1909 = vsub.s32 5, %v1908
    %v1910 = vrot.slane %v1176, %v1909
    %v1915 = vlaneseq
    %v1916 = vshrl.u32 %v1915, 7
    %v1917 = vsub.s32 1, %v1916
    %v1918 = vrot.slane %v1898, %v1917
    %v1919 = vlaneseq
    %v1920 = vshrl.u32 %v1919, 7
    %v1921 = vsub.s32 1, %v1920
    %v1922 = vrot.slane %v1902, %v1921
    %v1923 = vlaneseq
    %v1924 = vshrl.u32 %v1923, 7
    %v1925 = vsub.s32 1, %v1924
    %v1926 = vrot.slane %v1906, %v1925
    %v1927 = vlaneseq
    %v1928 = vshrl.u32 %v1927, 7
    %v1929 = vsub.s32 1, %v1928
    %v1930 = vrot.slane %v1910, %v1929
    %v1931 = vmul.f32 %v1831, %v1918
    %v1932 = vmul.f32 %v1832, %v1922
    %v1933 = vmul.f32 %v1833, %v1926
    %v1934 = vmul.f32 %v1834, %v1930
    %v1935 = vmul.f32 %v1835, %v1918
    %v1936 = vmul.f32 %v1836, %v1922
    %v1937 = vmul.f32 %v1837, %v1926
    %v1938 = vmul.f32 %v1838, %v1930
    %v1939 = vmul.f32 %v1839, %v1918
    %v1940 = vmul.f32 %v1840, %v1922
    %v1941 = vmul.f32 %v1841, %v1926
    %v1942 = vmul.f32 %v1842, %v1930
    %v1943 = vmul.f32 %v1843, %v1918
    %v1944 = vmul.f32 %v1844, %v1922
    %v1945 = vmul.f32 %v1845, %v1926
    %v1946 = vmul.f32 %v1846, %v1930
    %v1947 = vmul.f32 %v1847, %v1918
    %v1948 = vmul.f32 %v1848, %v1922
    %v1949 = vmul.f32 %v1849, %v1926
    %v1950 = vmul.f32 %v1850, %v1930
    %v1951 = vmul.f32 %v1851, %v1918
    %v1952 = vmul.f32 %v1852, %v1922
    %v1953 = vmul.f32 %v1853, %v1926
    %v1954 = vmul.f32 %v1854, %v1930
    %v1955 = vmul.f32 %v1855, %v1918
    %v1956 = vmul.f32 %v1856, %v1922
    %v1957 = vmul.f32 %v1857, %v1926
    %v1958 = vmul.f32 %v1858, %v1930
    %v1959 = vmul.f32 %v1859, %v1918
    %v1960 = vmul.f32 %v1860, %v1922
    %v1961 = vmul.f32 %v1861, %v1926
    %v1962 = vmul.f32 %v1862, %v1930
    %v1963 = vmul.f32 %v1863, %v1918
    %v1964 = vmul.f32 %v1864, %v1922
    %v1965 = vmul.f32 %v1865, %v1926
    %v1966 = vmul.f32 %v1866, %v1930
    %v1967 = vmul.f32 %v1867, %v1918
    %v1968 = vmul.f32 %v1868, %v1922
    %v1969 = vmul.f32 %v1869, %v1926
    %v1970 = vmul.f32 %v1870, %v1930
    %v1971 = vmul.f32 %v1871, %v1918
    %v1972 = vmul.f32 %v1872, %v1922
    %v1973 = vmul.f32 %v1873, %v1926
    %v1974 = vmul.f32 %v1874, %v1930
    %v1975 = vmul.f32 %v1875, %v1918
    %v1976 = vmul.f32 %v1876, %v1922
    %v1977 = vmul.f32 %v1877, %v1926
    %v1978 = vmul.f32 %v1878, %v1930
    %v1979 = vmul.f32 %v1879, %v1918
    %v1980 = vmul.f32 %v1880, %v1922
    %v1981 = vmul.f32 %v1881, %v1926
    %v1982 = vmul.f32 %v1882, %v1930
    %v1983 = vmul.f32 %v1883, %v1918
    %v1984 = vmul.f32 %v1884, %v1922
    %v1985 = vmul.f32 %v1885, %v1926
    %v1986 = vmul.f32 %v1886, %v1930
    %v1987 = vmul.f32 %v1887, %v1918
    %v1988 = vmul.f32 %v1888, %v1922
    %v1989 = vmul.f32 %v1889, %v1926
    %v1990 = vmul.f32 %v1890, %v1930
    %v1991 = vmul.f32 %v1891, %v1918
    %v1992 = vmul.f32 %v1892, %v1922
    %v1993 = vmul.f32 %v1893, %v1926
    %v1994 = vmul.f32 %v1894, %v1930
    %v1995 = vlaneseq
    %v1996 = vshrl.u32 %v1995, 7
    %v1997 = vsub.s32 1, %v1996
    %v1998 = vrot.slane %v900, %v1997
    %v1999 = vlaneseq
    %v2000 = vshrl.u32 %v1999, 7
    %v2001 = vsub.s32 5, %v2000
    %v2002 = vrot.slane %v900, %v2001
    %v2003 = vlaneseq
    %v2004 = vshrl.u32 %v2003, 7
    %v2005 = vsub.s32 1, %v2004
    %v2006 = vrot.slane %v901, %v2005
    %v2007 = vlaneseq
    %v2008 = vshrl.u32 %v2007, 7
    %v2009 = vsub.s32 5, %v2008
    %v2010 = vrot.slane %v901, %v2009
    %v2011 = vlaneseq
    %v2012 = vshrl.u32 %v2011, 7
    %v2013 = vsub.s32 1, %v2012
    %v2014 = vrot.slane %v1998, %v2013
    %v2015 = vlaneseq
    %v2016 = vshrl.u32 %v2015, 7
    %v2017 = vsub.s32 1, %v2016
    %v2018 = vrot.slane %v2002, %v2017
    %v2019 = vlaneseq
    %v2020 = vshrl.u32 %v2019, 7
    %v2021 = vsub.s32 1, %v2020
    %v2022 = vrot.slane %v2006, %v2021
    %v2023 = vlaneseq
    %v2024 = vshrl.u32 %v2023, 7
    %v2025 = vsub.s32 1, %v2024
    %v2026 = vrot.slane %v2010, %v2025
    %vm2027 = vcmp.eq.s32.totalorder %v935, %v2014
    %vm2028 = vcmp.eq.s32.totalorder %v935, %v2018
    %vm2029 = vcmp.eq.s32.totalorder %v935, %v2022
    %vm2030 = vcmp.eq.s32.totalorder %v935, %v2026
    %vm2031 = vcmp.eq.s32.totalorder %v936, %v2014
    %vm2032 = vcmp.eq.s32.totalorder %v936, %v2018
    %vm2033 = vcmp.eq.s32.totalorder %v936, %v2022
    %vm2034 = vcmp.eq.s32.totalorder %v936, %v2026
    %vm2035 = vcmp.eq.s32.totalorder %v937, %v2014
    %vm2036 = vcmp.eq.s32.totalorder %v937, %v2018
    %vm2037 = vcmp.eq.s32.totalorder %v937, %v2022
    %vm2038 = vcmp.eq.s32.totalorder %v937, %v2026
    %vm2039 = vcmp.eq.s32.totalorder %v938, %v2014
    %vm2040 = vcmp.eq.s32.totalorder %v938, %v2018
    %vm2041 = vcmp.eq.s32.totalorder %v938, %v2022
    %vm2042 = vcmp.eq.s32.totalorder %v938, %v2026
    %vm2043 = vcmp.eq.s32.totalorder %v939, %v2014
    %vm2044 = vcmp.eq.s32.totalorder %v939, %v2018
    %vm2045 = vcmp.eq.s32.totalorder %v939, %v2022
    %vm2046 = vcmp.eq.s32.totalorder %v939, %v2026
    %vm2047 = vcmp.eq.s32.totalorder %v940, %v2014
    %vm2048 = vcmp.eq.s32.totalorder %v940, %v2018
    %vm2049 = vcmp.eq.s32.totalorder %v940, %v2022
    %vm2050 = vcmp.eq.s32.totalorder %v940, %v2026
    %vm2051 = vcmp.eq.s32.totalorder %v941, %v2014
    %vm2052 = vcmp.eq.s32.totalorder %v941, %v2018
    %vm2053 = vcmp.eq.s32.totalorder %v941, %v2022
    %vm2054 = vcmp.eq.s32.totalorder %v941, %v2026
    %vm2055 = vcmp.eq.s32.totalorder %v942, %v2014
    %vm2056 = vcmp.eq.s32.totalorder %v942, %v2018
    %vm2057 = vcmp.eq.s32.totalorder %v942, %v2022
    %vm2058 = vcmp.eq.s32.totalorder %v942, %v2026
    %vm2059 = vcmp.eq.s32.totalorder %v943, %v2014
    %vm2060 = vcmp.eq.s32.totalorder %v943, %v2018
    %vm2061 = vcmp.eq.s32.totalorder %v943, %v2022
    %vm2062 = vcmp.eq.s32.totalorder %v943, %v2026
    %vm2063 = vcmp.eq.s32.totalorder %v944, %v2014
    %vm2064 = vcmp.eq.s32.totalorder %v944, %v2018
    %vm2065 = vcmp.eq.s32.totalorder %v944, %v2022
    %vm2066 = vcmp.eq.s32.totalorder %v944, %v2026
    %vm2067 = vcmp.eq.s32.totalorder %v945, %v2014
    %vm2068 = vcmp.eq.s32.totalorder %v945, %v2018
    %vm2069 = vcmp.eq.s32.totalorder %v945, %v2022
    %vm2070 = vcmp.eq.s32.totalorder %v945, %v2026
    %vm2071 = vcmp.eq.s32.totalorder %v946, %v2014
    %vm2072 = vcmp.eq.s32.totalorder %v946, %v2018
    %vm2073 = vcmp.eq.s32.totalorder %v946, %v2022
    %vm2074 = vcmp.eq.s32.totalorder %v946, %v2026
    %vm2075 = vcmp.eq.s32.totalorder %v947, %v2014
    %vm2076 = vcmp.eq.s32.totalorder %v947, %v2018
    %vm2077 = vcmp.eq.s32.totalorder %v947, %v2022
    %vm2078 = vcmp.eq.s32.totalorder %v947, %v2026
    %vm2079 = vcmp.eq.s32.totalorder %v948, %v2014
    %vm2080 = vcmp.eq.s32.totalorder %v948, %v2018
    %vm2081 = vcmp.eq.s32.totalorder %v948, %v2022
    %vm2082 = vcmp.eq.s32.totalorder %v948, %v2026
    %vm2083 = vcmp.eq.s32.totalorder %v949, %v2014
    %vm2084 = vcmp.eq.s32.totalorder %v949, %v2018
    %vm2085 = vcmp.eq.s32.totalorder %v949, %v2022
    %vm2086 = vcmp.eq.s32.totalorder %v949, %v2026
    %vm2087 = vcmp.eq.s32.totalorder %v950, %v2014
    %vm2088 = vcmp.eq.s32.totalorder %v950, %v2018
    %vm2089 = vcmp.eq.s32.totalorder %v950, %v2022
    %vm2090 = vcmp.eq.s32.totalorder %v950, %v2026
    %v2091 = vsel %vm2027, 1, 0
    %v2092 = vsel %vm2028, 1, 0
    %v2093 = vsel %vm2029, 1, 0
    %v2094 = vsel %vm2030, 1, 0
    %v2095 = vsel %vm2031, 1, 0
    %v2096 = vsel %vm2032, 1, 0
    %v2097 = vsel %vm2033, 1, 0
    %v2098 = vsel %vm2034, 1, 0
    %v2099 = vsel %vm2035, 1, 0
    %v2100 = vsel %vm2036, 1, 0
    %v2101 = vsel %vm2037, 1, 0
    %v2102 = vsel %vm2038, 1, 0
    %v2103 = vsel %vm2039, 1, 0
    %v2104 = vsel %vm2040, 1, 0
    %v2105 = vsel %vm2041, 1, 0
    %v2106 = vsel %vm2042, 1, 0
    %v2107 = vsel %vm2043, 1, 0
    %v2108 = vsel %vm2044, 1, 0
    %v2109 = vsel %vm2045, 1, 0
    %v2110 = vsel %vm2046, 1, 0
    %v2111 = vsel %vm2047, 1, 0
    %v2112 = vsel %vm2048, 1, 0
    %v2113 = vsel %vm2049, 1, 0
    %v2114 = vsel %vm2050, 1, 0
    %v2115 = vsel %vm2051, 1, 0
    %v2116 = vsel %vm2052, 1, 0
    %v2117 = vsel %vm2053, 1, 0
    %v2118 = vsel %vm2054, 1, 0
    %v2119 = vsel %vm2055, 1, 0
    %v2120 = vsel %vm2056, 1, 0
    %v2121 = vsel %vm2057, 1, 0
    %v2122 = vsel %vm2058, 1, 0
    %v2123 = vsel %vm2059, 1, 0
    %v2124 = vsel %vm2060, 1, 0
    %v2125 = vsel %vm2061, 1, 0
    %v2126 = vsel %vm2062, 1, 0
    %v2127 = vsel %vm2063, 1, 0
    %v2128 = vsel %vm2064, 1, 0
    %v2129 = vsel %vm2065, 1, 0
    %v2130 = vsel %vm2066, 1, 0
    %v2131 = vsel %vm2067, 1, 0
    %v2132 = vsel %vm2068, 1, 0
    %v2133 = vsel %vm2069, 1, 0
    %v2134 = vsel %vm2070, 1, 0
    %v2135 = vsel %vm2071, 1, 0
    %v2136 = vsel %vm2072, 1, 0
    %v2137 = vsel %vm2073, 1, 0
    %v2138 = vsel %vm2074, 1, 0
    %v2139 = vsel %vm2075, 1, 0
    %v2140 = vsel %vm2076, 1, 0
    %v2141 = vsel %vm2077, 1, 0
    %v2142 = vsel %vm2078, 1, 0
    %v2143 = vsel %vm2079, 1, 0
    %v2144 = vsel %vm2080, 1, 0
    %v2145 = vsel %vm2081, 1, 0
    %v2146 = vsel %vm2082, 1, 0
    %v2147 = vsel %vm2083, 1, 0
    %v2148 = vsel %vm2084, 1, 0
    %v2149 = vsel %vm2085, 1, 0
    %v2150 = vsel %vm2086, 1, 0
    %v2151 = vsel %vm2087, 1, 0
    %v2152 = vsel %vm2088, 1, 0
    %v2153 = vsel %vm2089, 1, 0
    %v2154 = vsel %vm2090, 1, 0
    %v2155 = vcvt.s32.f32 %v2091
    %v2156 = vcvt.s32.f32 %v2092
    %v2157 = vcvt.s32.f32 %v2093
    %v2158 = vcvt.s32.f32 %v2094
    %v2159 = vcvt.s32.f32 %v2095
    %v2160 = vcvt.s32.f32 %v2096
    %v2161 = vcvt.s32.f32 %v2097
    %v2162 = vcvt.s32.f32 %v2098
    %v2163 = vcvt.s32.f32 %v2099
    %v2164 = vcvt.s32.f32 %v2100
    %v2165 = vcvt.s32.f32 %v2101
    %v2166 = vcvt.s32.f32 %v2102
    %v2167 = vcvt.s32.f32 %v2103
    %v2168 = vcvt.s32.f32 %v2104
    %v2169 = vcvt.s32.f32 %v2105
    %v2170 = vcvt.s32.f32 %v2106
    %v2171 = vcvt.s32.f32 %v2107
    %v2172 = vcvt.s32.f32 %v2108
    %v2173 = vcvt.s32.f32 %v2109
    %v2174 = vcvt.s32.f32 %v2110
    %v2175 = vcvt.s32.f32 %v2111
    %v2176 = vcvt.s32.f32 %v2112
    %v2177 = vcvt.s32.f32 %v2113
    %v2178 = vcvt.s32.f32 %v2114
    %v2179 = vcvt.s32.f32 %v2115
    %v2180 = vcvt.s32.f32 %v2116
    %v2181 = vcvt.s32.f32 %v2117
    %v2182 = vcvt.s32.f32 %v2118
    %v2183 = vcvt.s32.f32 %v2119
    %v2184 = vcvt.s32.f32 %v2120
    %v2185 = vcvt.s32.f32 %v2121
    %v2186 = vcvt.s32.f32 %v2122
    %v2187 = vcvt.s32.f32 %v2123
    %v2188 = vcvt.s32.f32 %v2124
    %v2189 = vcvt.s32.f32 %v2125
    %v2190 = vcvt.s32.f32 %v2126
    %v2191 = vcvt.s32.f32 %v2127
    %v2192 = vcvt.s32.f32 %v2128
    %v2193 = vcvt.s32.f32 %v2129
    %v2194 = vcvt.s32.f32 %v2130
    %v2195 = vcvt.s32.f32 %v2131
    %v2196 = vcvt.s32.f32 %v2132
    %v2197 = vcvt.s32.f32 %v2133
    %v2198 = vcvt.s32.f32 %v2134
    %v2199 = vcvt.s32.f32 %v2135
    %v2200 = vcvt.s32.f32 %v2136
    %v2201 = vcvt.s32.f32 %v2137
    %v2202 = vcvt.s32.f32 %v2138
    %v2203 = vcvt.s32.f32 %v2139
    %v2204 = vcvt.s32.f32 %v2140
    %v2205 = vcvt.s32.f32 %v2141
    %v2206 = vcvt.s32.f32 %v2142
    %v2207 = vcvt.s32.f32 %v2143
    %v2208 = vcvt.s32.f32 %v2144
    %v2209 = vcvt.s32.f32 %v2145
    %v2210 = vcvt.s32.f32 %v2146
    %v2211 = vcvt.s32.f32 %v2147
    %v2212 = vcvt.s32.f32 %v2148
    %v2213 = vcvt.s32.f32 %v2149
    %v2214 = vcvt.s32.f32 %v2150
    %v2215 = vcvt.s32.f32 %v2151
    %v2216 = vcvt.s32.f32 %v2152
    %v2217 = vcvt.s32.f32 %v2153
    %v2218 = vcvt.s32.f32 %v2154
    %v2219 = vlaneseq
    %v2220 = vshrl.u32 %v2219, 7
    %v2221 = vsub.s32 1, %v2220
    %v2222 = vrot.slane %v1503, %v2221
    %v2223 = vlaneseq
    %v2224 = vshrl.u32 %v2223, 7
    %v2225 = vsub.s32 5, %v2224
    %v2226 = vrot.slane %v1503, %v2225
    %v2227 = vlaneseq
    %v2228 = vshrl.u32 %v2227, 7
    %v2229 = vsub.s32 1, %v2228
    %v2230 = vrot.slane %v1504, %v2229
    %v2231 = vlaneseq
    %v2232 = vshrl.u32 %v2231, 7
    %v2233 = vsub.s32 5, %v2232
    %v2234 = vrot.slane %v1504, %v2233
    %v2239 = vlaneseq
    %v2240 = vshrl.u32 %v2239, 7
    %v2241 = vsub.s32 1, %v2240
    %v2242 = vrot.slane %v2222, %v2241
    %v2243 = vlaneseq
    %v2244 = vshrl.u32 %v2243, 7
    %v2245 = vsub.s32 1, %v2244
    %v2246 = vrot.slane %v2226, %v2245
    %v2247 = vlaneseq
    %v2248 = vshrl.u32 %v2247, 7
    %v2249 = vsub.s32 1, %v2248
    %v2250 = vrot.slane %v2230, %v2249
    %v2251 = vlaneseq
    %v2252 = vshrl.u32 %v2251, 7
    %v2253 = vsub.s32 1, %v2252
    %v2254 = vrot.slane %v2234, %v2253
    %v2255 = vmul.f32 %v2155, %v2242
    %v2256 = vmul.f32 %v2156, %v2246
    %v2257 = vmul.f32 %v2157, %v2250
    %v2258 = vmul.f32 %v2158, %v2254
    %v2259 = vmul.f32 %v2159, %v2242
    %v2260 = vmul.f32 %v2160, %v2246
    %v2261 = vmul.f32 %v2161, %v2250
    %v2262 = vmul.f32 %v2162, %v2254
    %v2263 = vmul.f32 %v2163, %v2242
    %v2264 = vmul.f32 %v2164, %v2246
    %v2265 = vmul.f32 %v2165, %v2250
    %v2266 = vmul.f32 %v2166, %v2254
    %v2267 = vmul.f32 %v2167, %v2242
    %v2268 = vmul.f32 %v2168, %v2246
    %v2269 = vmul.f32 %v2169, %v2250
    %v2270 = vmul.f32 %v2170, %v2254
    %v2271 = vmul.f32 %v2171, %v2242
    %v2272 = vmul.f32 %v2172, %v2246
    %v2273 = vmul.f32 %v2173, %v2250
    %v2274 = vmul.f32 %v2174, %v2254
    %v2275 = vmul.f32 %v2175, %v2242
    %v2276 = vmul.f32 %v2176, %v2246
    %v2277 = vmul.f32 %v2177, %v2250
    %v2278 = vmul.f32 %v2178, %v2254
    %v2279 = vmul.f32 %v2179, %v2242
    %v2280 = vmul.f32 %v2180, %v2246
    %v2281 = vmul.f32 %v2181, %v2250
    %v2282 = vmul.f32 %v2182, %v2254
    %v2283 = vmul.f32 %v2183, %v2242
    %v2284 = vmul.f32 %v2184, %v2246
    %v2285 = vmul.f32 %v2185, %v2250
    %v2286 = vmul.f32 %v2186, %v2254
    %v2287 = vmul.f32 %v2187, %v2242
    %v2288 = vmul.f32 %v2188, %v2246
    %v2289 = vmul.f32 %v2189, %v2250
    %v2290 = vmul.f32 %v2190, %v2254
    %v2291 = vmul.f32 %v2191, %v2242
    %v2292 = vmul.f32 %v2192, %v2246
    %v2293 = vmul.f32 %v2193, %v2250
    %v2294 = vmul.f32 %v2194, %v2254
    %v2295 = vmul.f32 %v2195, %v2242
    %v2296 = vmul.f32 %v2196, %v2246
    %v2297 = vmul.f32 %v2197, %v2250
    %v2298 = vmul.f32 %v2198, %v2254
    %v2299 = vmul.f32 %v2199, %v2242
    %v2300 = vmul.f32 %v2200, %v2246
    %v2301 = vmul.f32 %v2201, %v2250
    %v2302 = vmul.f32 %v2202, %v2254
    %v2303 = vmul.f32 %v2203, %v2242
    %v2304 = vmul.f32 %v2204, %v2246
    %v2305 = vmul.f32 %v2205, %v2250
    %v2306 = vmul.f32 %v2206, %v2254
    %v2307 = vmul.f32 %v2207, %v2242
    %v2308 = vmul.f32 %v2208, %v2246
    %v2309 = vmul.f32 %v2209, %v2250
    %v2310 = vmul.f32 %v2210, %v2254
    %v2311 = vmul.f32 %v2211, %v2242
    %v2312 = vmul.f32 %v2212, %v2246
    %v2313 = vmul.f32 %v2213, %v2250
    %v2314 = vmul.f32 %v2214, %v2254
    %v2315 = vmul.f32 %v2215, %v2242
    %v2316 = vmul.f32 %v2216, %v2246
    %v2317 = vmul.f32 %v2217, %v2250
    %v2318 = vmul.f32 %v2218, %v2254
    %v2319 = vadd.f32 %v1931, %v2255
    %v2320 = vadd.f32 %v1932, %v2256
    %v2321 = vadd.f32 %v1933, %v2257
    %v2322 = vadd.f32 %v1934, %v2258
    %v2323 = vadd.f32 %v1935, %v2259
    %v2324 = vadd.f32 %v1936, %v2260
    %v2325 = vadd.f32 %v1937, %v2261
    %v2326 = vadd.f32 %v1938, %v2262
    %v2327 = vadd.f32 %v1939, %v2263
    %v2328 = vadd.f32 %v1940, %v2264
    %v2329 = vadd.f32 %v1941, %v2265
    %v2330 = vadd.f32 %v1942, %v2266
    %v2331 = vadd.f32 %v1943, %v2267
    %v2332 = vadd.f32 %v1944, %v2268
    %v2333 = vadd.f32 %v1945, %v2269
    %v2334 = vadd.f32 %v1946, %v2270
    %v2335 = vadd.f32 %v1947, %v2271
    %v2336 = vadd.f32 %v1948, %v2272
    %v2337 = vadd.f32 %v1949, %v2273
    %v2338 = vadd.f32 %v1950, %v2274
    %v2339 = vadd.f32 %v1951, %v2275
    %v2340 = vadd.f32 %v1952, %v2276
    %v2341 = vadd.f32 %v1953, %v2277
    %v2342 = vadd.f32 %v1954, %v2278
    %v2343 = vadd.f32 %v1955, %v2279
    %v2344 = vadd.f32 %v1956, %v2280
    %v2345 = vadd.f32 %v1957, %v2281
    %v2346 = vadd.f32 %v1958, %v2282
    %v2347 = vadd.f32 %v1959, %v2283
    %v2348 = vadd.f32 %v1960, %v2284
    %v2349 = vadd.f32 %v1961, %v2285
    %v2350 = vadd.f32 %v1962, %v2286
    %v2351 = vadd.f32 %v1963, %v2287
    %v2352 = vadd.f32 %v1964, %v2288
    %v2353 = vadd.f32 %v1965, %v2289
    %v2354 = vadd.f32 %v1966, %v2290
    %v2355 = vadd.f32 %v1967, %v2291
    %v2356 = vadd.f32 %v1968, %v2292
    %v2357 = vadd.f32 %v1969, %v2293
    %v2358 = vadd.f32 %v1970, %v2294
    %v2359 = vadd.f32 %v1971, %v2295
    %v2360 = vadd.f32 %v1972, %v2296
    %v2361 = vadd.f32 %v1973, %v2297
    %v2362 = vadd.f32 %v1974, %v2298
    %v2363 = vadd.f32 %v1975, %v2299
    %v2364 = vadd.f32 %v1976, %v2300
    %v2365 = vadd.f32 %v1977, %v2301
    %v2366 = vadd.f32 %v1978, %v2302
    %v2367 = vadd.f32 %v1979, %v2303
    %v2368 = vadd.f32 %v1980, %v2304
    %v2369 = vadd.f32 %v1981, %v2305
    %v2370 = vadd.f32 %v1982, %v2306
    %v2371 = vadd.f32 %v1983, %v2307
    %v2372 = vadd.f32 %v1984, %v2308
    %v2373 = vadd.f32 %v1985, %v2309
    %v2374 = vadd.f32 %v1986, %v2310
    %v2375 = vadd.f32 %v1987, %v2311
    %v2376 = vadd.f32 %v1988, %v2312
    %v2377 = vadd.f32 %v1989, %v2313
    %v2378 = vadd.f32 %v1990, %v2314
    %v2379 = vadd.f32 %v1991, %v2315
    %v2380 = vadd.f32 %v1992, %v2316
    %v2381 = vadd.f32 %v1993, %v2317
    %v2382 = vadd.f32 %v1994, %v2318
    %v2383 = vmul.f32 %v1607, %v2319
    %v2384 = vmul.f32 %v1608, %v2320
    %v2385 = vmul.f32 %v1609, %v2321
    %v2386 = vmul.f32 %v1610, %v2322
    %v2387 = vmul.f32 %v1611, %v2323
    %v2388 = vmul.f32 %v1612, %v2324
    %v2389 = vmul.f32 %v1613, %v2325
    %v2390 = vmul.f32 %v1614, %v2326
    %v2391 = vmul.f32 %v1615, %v2327
    %v2392 = vmul.f32 %v1616, %v2328
    %v2393 = vmul.f32 %v1617, %v2329
    %v2394 = vmul.f32 %v1618, %v2330
    %v2395 = vmul.f32 %v1619, %v2331
    %v2396 = vmul.f32 %v1620, %v2332
    %v2397 = vmul.f32 %v1621, %v2333
    %v2398 = vmul.f32 %v1622, %v2334
    %v2399 = vmul.f32 %v1623, %v2335
    %v2400 = vmul.f32 %v1624, %v2336
    %v2401 = vmul.f32 %v1625, %v2337
    %v2402 = vmul.f32 %v1626, %v2338
    %v2403 = vmul.f32 %v1627, %v2339
    %v2404 = vmul.f32 %v1628, %v2340
    %v2405 = vmul.f32 %v1629, %v2341
    %v2406 = vmul.f32 %v1630, %v2342
    %v2407 = vmul.f32 %v1631, %v2343
    %v2408 = vmul.f32 %v1632, %v2344
    %v2409 = vmul.f32 %v1633, %v2345
    %v2410 = vmul.f32 %v1634, %v2346
    %v2411 = vmul.f32 %v1635, %v2347
    %v2412 = vmul.f32 %v1636, %v2348
    %v2413 = vmul.f32 %v1637, %v2349
    %v2414 = vmul.f32 %v1638, %v2350
    %v2415 = vmul.f32 %v1639, %v2351
    %v2416 = vmul.f32 %v1640, %v2352
    %v2417 = vmul.f32 %v1641, %v2353
    %v2418 = vmul.f32 %v1642, %v2354
    %v2419 = vmul.f32 %v1643, %v2355
    %v2420 = vmul.f32 %v1644, %v2356
    %v2421 = vmul.f32 %v1645, %v2357
    %v2422 = vmul.f32 %v1646, %v2358
    %v2423 = vmul.f32 %v1647, %v2359
    %v2424 = vmul.f32 %v1648, %v2360
    %v2425 = vmul.f32 %v1649, %v2361
    %v2426 = vmul.f32 %v1650, %v2362
    %v2427 = vmul.f32 %v1651, %v2363
    %v2428 = vmul.f32 %v1652, %v2364
    %v2429 = vmul.f32 %v1653, %v2365
    %v2430 = vmul.f32 %v1654, %v2366
    %v2431 = vmul.f32 %v1655, %v2367
    %v2432 = vmul.f32 %v1656, %v2368
    %v2433 = vmul.f32 %v1657, %v2369
    %v2434 = vmul.f32 %v1658, %v2370
    %v2435 = vmul.f32 %v1659, %v2371
    %v2436 = vmul.f32 %v1660, %v2372
    %v2437 = vmul.f32 %v1661, %v2373
    %v2438 = vmul.f32 %v1662, %v2374
    %v2439 = vmul.f32 %v1663, %v2375
    %v2440 = vmul.f32 %v1664, %v2376
    %v2441 = vmul.f32 %v1665, %v2377
    %v2442 = vmul.f32 %v1666, %v2378
    %v2443 = vmul.f32 %v1667, %v2379
    %v2444 = vmul.f32 %v1668, %v2380
    %v2445 = vmul.f32 %v1669, %v2381
    %v2446 = vmul.f32 %v1670, %v2382
    %2447 = vmatprep.subr.mxu0 %v2384
    %2448 = vmatpush1.msra.mxu0 %v2383
    %2449 = vmatprep.subr.mxu0 %v2388
    %2450 = vmatpush1.msra.mxu0 %v2387
    %2451 = vmatprep.subr.mxu0 %v2392
    %2452 = vmatpush1.msra.mxu0 %v2391
    %2453 = vmatprep.subr.mxu0 %v2396
    %2454 = vmatpush1.msra.mxu0 %v2395
    %2455 = vmatprep.subr.mxu0 %v2400
    %2456 = vmatpush1.msra.mxu0 %v2399
    %2457 = vmatprep.subr.mxu0 %v2404
    %2458 = vmatpush1.msra.mxu0 %v2403
    %2459 = vmatprep.subr.mxu0 %v2408
    %2460 = vmatpush1.msra.mxu0 %v2407
    %2461 = vmatprep.subr.mxu0 %v2412
    %2462 = vmatpush1.msra.mxu0 %v2411
    %2463 = vmatprep.subr.mxu0 %v2416
    %2464 = vmatpush1.msra.mxu0 %v2415
    %2465 = vmatprep.subr.mxu0 %v2420
    %2466 = vmatpush1.msra.mxu0 %v2419
    %2467 = vmatprep.subr.mxu0 %v2424
    %2468 = vmatpush1.msra.mxu0 %v2423
    %2469 = vmatprep.subr.mxu0 %v2428
    %2470 = vmatpush1.msra.mxu0 %v2427
    %2471 = vmatprep.subr.mxu0 %v2432
    %2472 = vmatpush1.msra.mxu0 %v2431
    %2473 = vmatprep.subr.mxu0 %v2436
    %2474 = vmatpush1.msra.mxu0 %v2435
    %2475 = vmatprep.subr.mxu0 %v2440
    %2476 = vmatpush1.msra.mxu0 %v2439
    %2477 = vmatprep.subr.mxu0 %v2444
    %2478 = vmatpush1.msra.mxu0 %v2443
    %2479 = vmatprep.subr.mxu0 0.0
    %2480 = vmatpush1.msra.mxu0 0.0
    %2481 = vmatprep.subr.mxu0 0.0
    %2482 = vmatpush1.msra.mxu0 0.0
    %2483 = vmatprep.subr.mxu0 0.0
    %2484 = vmatpush1.msra.mxu0 0.0
    %2485 = vmatprep.subr.mxu0 0.0
    %2486 = vmatpush1.msra.mxu0 0.0
    %2487 = vmatprep.subr.mxu0 0.0
    %2488 = vmatpush1.msra.mxu0 0.0
    %2489 = vmatprep.subr.mxu0 0.0
    %2490 = vmatpush1.msra.mxu0 0.0
    %2491 = vmatprep.subr.mxu0 0.0
    %2492 = vmatpush1.msra.mxu0 0.0
    %2493 = vmatprep.subr.mxu0 0.0
    %2494 = vmatpush1.msra.mxu0 0.0
    %2495 = vmatprep.subr.mxu0 0.0
    %2496 = vmatpush1.msra.mxu0 0.0
    %2497 = vmatprep.subr.mxu0 0.0
    %2498 = vmatpush1.msra.mxu0 0.0
    %2499 = vmatprep.subr.mxu0 0.0
    %2500 = vmatpush1.msra.mxu0 0.0
    %2501 = vmatprep.subr.mxu0 0.0
    %2502 = vmatpush1.msra.mxu0 0.0
    %2503 = vmatprep.subr.mxu0 0.0
    %2504 = vmatpush1.msra.mxu0 0.0
    %2505 = vmatprep.subr.mxu0 0.0
    %2506 = vmatpush1.msra.mxu0 0.0
    %2507 = vmatprep.subr.mxu0 0.0
    %2508 = vmatpush1.msra.mxu0 0.0
    %2509 = vmatprep.subr.mxu0 0.0
    %2510 = vmatpush1.msra.mxu0 0.0
    %2511 = vmatprep.mubr.f32.mxu0 0.0
    %2512 = vmatmul.mubr.f32.gmra.mrb[0].mxu0 %v71
    %v2513 = vpop.f32.mrb[0].mxu0
    %v2514 = vadd.f32 0.0, %v2513
    %v2515 = vpop.f32.mrb[0].mxu0
    %v2516 = vadd.f32 0.0, %v2515
    %2517 = vdwg.mxu0
    %2518 = vmatprep.subr.mxu0 %v2386
    %2519 = vmatpush1.msra.mxu0 %v2385
    %2520 = vmatprep.subr.mxu0 %v2390
    %2521 = vmatpush1.msra.mxu0 %v2389
    %2522 = vmatprep.subr.mxu0 %v2394
    %2523 = vmatpush1.msra.mxu0 %v2393
    %2524 = vmatprep.subr.mxu0 %v2398
    %2525 = vmatpush1.msra.mxu0 %v2397
    %2526 = vmatprep.subr.mxu0 %v2402
    %2527 = vmatpush1.msra.mxu0 %v2401
    %2528 = vmatprep.subr.mxu0 %v2406
    %2529 = vmatpush1.msra.mxu0 %v2405
    %2530 = vmatprep.subr.mxu0 %v2410
    %2531 = vmatpush1.msra.mxu0 %v2409
    %2532 = vmatprep.subr.mxu0 %v2414
    %2533 = vmatpush1.msra.mxu0 %v2413
    %2534 = vmatprep.subr.mxu0 %v2418
    %2535 = vmatpush1.msra.mxu0 %v2417
    %2536 = vmatprep.subr.mxu0 %v2422
    %2537 = vmatpush1.msra.mxu0 %v2421
    %2538 = vmatprep.subr.mxu0 %v2426
    %2539 = vmatpush1.msra.mxu0 %v2425
    %2540 = vmatprep.subr.mxu0 %v2430
    %2541 = vmatpush1.msra.mxu0 %v2429
    %2542 = vmatprep.subr.mxu0 %v2434
    %2543 = vmatpush1.msra.mxu0 %v2433
    %2544 = vmatprep.subr.mxu0 %v2438
    %2545 = vmatpush1.msra.mxu0 %v2437
    %2546 = vmatprep.subr.mxu0 %v2442
    %2547 = vmatpush1.msra.mxu0 %v2441
    %2548 = vmatprep.subr.mxu0 %v2446
    %2549 = vmatpush1.msra.mxu0 %v2445
    %2550 = vmatprep.subr.mxu0 0.0
    %2551 = vmatpush1.msra.mxu0 0.0
    %2552 = vmatprep.subr.mxu0 0.0
    %2553 = vmatpush1.msra.mxu0 0.0
    %2554 = vmatprep.subr.mxu0 0.0
    %2555 = vmatpush1.msra.mxu0 0.0
    %2556 = vmatprep.subr.mxu0 0.0
    %2557 = vmatpush1.msra.mxu0 0.0
    %2558 = vmatprep.subr.mxu0 0.0
    %2559 = vmatpush1.msra.mxu0 0.0
    %2560 = vmatprep.subr.mxu0 0.0
    %2561 = vmatpush1.msra.mxu0 0.0
    %2562 = vmatprep.subr.mxu0 0.0
    %2563 = vmatpush1.msra.mxu0 0.0
    %2564 = vmatprep.subr.mxu0 0.0
    %2565 = vmatpush1.msra.mxu0 0.0
    %2566 = vmatprep.subr.mxu0 0.0
    %2567 = vmatpush1.msra.mxu0 0.0
    %2568 = vmatprep.subr.mxu0 0.0
    %2569 = vmatpush1.msra.mxu0 0.0
    %2570 = vmatprep.subr.mxu0 0.0
    %2571 = vmatpush1.msra.mxu0 0.0
    %2572 = vmatprep.subr.mxu0 0.0
    %2573 = vmatpush1.msra.mxu0 0.0
    %2574 = vmatprep.subr.mxu0 0.0
    %2575 = vmatpush1.msra.mxu0 0.0
    %2576 = vmatprep.subr.mxu0 0.0
    %2577 = vmatpush1.msra.mxu0 0.0
    %2578 = vmatprep.subr.mxu0 0.0
    %2579 = vmatpush1.msra.mxu0 0.0
    %2580 = vmatprep.subr.mxu0 0.0
    %2581 = vmatpush1.msra.mxu0 0.0
    %2582 = vmatprep.mubr.f32.mxu0 0.0
    %2583 = vmatmul.mubr.f32.gmra.mrb[0].mxu0 %v71
    %v2584 = vpop.f32.mrb[0].mxu0
    %v2585 = vadd.f32 0.0, %v2584
    %v2586 = vpop.f32.mrb[0].mxu0
    %v2587 = vadd.f32 0.0, %v2586
    %2588 = vdwg.mxu0
    %v2593 = vcombine.low %v2514, %v2516
    %v2594 = vcombine.low %v2585, %v2587
    %2597 = vst [vmem:[#allocation8] sm:$0xff] %v2593
    %2598 = vst [vmem:[#allocation8 + $0x8] sm:$0xff] %v2594
    // Predicated region
    $region46: #{tpu_custom_call.1} parent=1 // pred_check
      _
    $region47: #{tpu_custom_call.1} parent=1 // pred_check_branch
      %2600 = sbr.rel (0) target = $region49
    $region48: #{tpu_custom_call.1} parent=1 // pred_region
      %s2602 = ssub.s32 256, 256
      %2603 = vsyncadd [#allocation4], %s2602
      %s2605 = sshll.u32 [#allocation8], 4
      %s2606 = int_to_ptr.vmem [resolvable:$true] %s2605
      %2608 = dma.vmem_to_hbm [thread:$0]  %s2606, 256, %s8, [#allocation4]
    $region49: #{tpu_custom_call.1} parent=1 // pred_fallthru
      _
    // Predicated region
    $region50: #{tpu_custom_call.1} parent=1 // pred_check
      _
    $region51: #{tpu_custom_call.1} parent=1 // pred_check_branch
      %2610 = sbr.rel (0) target = $region53
    $region52: #{tpu_custom_call.1} parent=1 // pred_region
      %2611 = dma.done [#allocation4], 256
    $region53: #{tpu_custom_call.1} parent=1 // pred_fallthru
      _
    %2612 = vsyncpa [#allocation3], 1
    %2613 = vsyncpa [#allocation6], 1
    %2614 = vsyncpa [#allocation4], 1

</llo_original>
